<compile_context>
chip_gen: v6e
topology: v6e:2x2x1
jax: 0.10.0
libtpu: 0.0.40
codegen_flags: <defaults>
</compile_context>

<pallas_src>
import jax
import jax.numpy as jnp
from jax import lax
from jax.experimental import pallas as pl
from jax.experimental.pallas import tpu as pltpu


def _vmem_limit_bytes():
    """~70% of this chip's physical VMEM (generation-aware); conservative fallback."""
    try:
        cap = getattr(pltpu.get_tpu_info(), "vmem_capacity_bytes", None)
    except Exception:
        cap = None
    if not cap:
        cap = 64 * 1024 * 1024  # v7x has the smallest physical VMEM -> safe everywhere
    return int(cap * 0.7)


def _pick_tile(total, candidates):
    for c in candidates:
        if total % c == 0:
            return c
    return None


# --------------------------- kernel 1: fused q/k/v projections ---------------------------
# NOTE: W_q/W_k/W_v cannot be concatenated into one matmul here because queries/keys/values
# are distinct inputs in the module signature; instead the three matmuls share one kernel
# and a tall row tile (tr up to 512) so the MXU stays well filled even for small B.
def _proj_kernel(q_in_ref, k_in_ref, v_in_ref,
                 wq_ref, bq_ref, wk_ref, bk_ref, wv_ref, bv_ref,
                 q_out_ref, k_out_ref, v_out_ref):
    q_out_ref[...] = (jnp.dot(q_in_ref[...], wq_ref[...],
                              preferred_element_type=jnp.float32)
                      + bq_ref[...]).astype(q_out_ref.dtype)
    k_out_ref[...] = (jnp.dot(k_in_ref[...], wk_ref[...],
                              preferred_element_type=jnp.float32)
                      + bk_ref[...]).astype(k_out_ref.dtype)
    v_out_ref[...] = (jnp.dot(v_in_ref[...], wv_ref[...],
                              preferred_element_type=jnp.float32)
                      + bv_ref[...]).astype(v_out_ref.dtype)


# -------------- kernel 2: fused offset-attention (softmax once) + fc_out + ReLU ----------
def _fused_attn_kernel(q_ref, k_ref, v_ref, values_ref, wout_ref, bout_ref,
                       out_ref, p_ref, colsum_ref):
    # Per-batch blocks:
    #   q_ref      (1, nq, TQ, d_k)      values_ref (1, nq, TQ, d_model)
    #   k_ref      (1, N, d_k)           v_ref      (1, N, d_v)
    #   wout_ref   (d_v, d_model)        bout_ref   (1, d_model)     (BatchNorm folded in)
    #   out_ref    (1, nq, TQ, d_model)
    # Scratch: p_ref (nq, TQ, N) f32 cached row-softmax tiles; colsum_ref (1, N) f32.
    nq = q_ref.shape[1]
    k = k_ref[0]                                        # (N, d_k)
    v = v_ref[0]                                        # (N, d_v)

    colsum_ref[...] = jnp.zeros_like(colsum_ref)

    # ---- pass 1: each row-softmax tile computed ONCE, cached, column sums accumulated.
    def _pass1(i, carry):
        q = q_ref[0, i]                                 # (TQ, d_k)
        # q @ k^T without materializing k^T: contract the last dims of both operands.
        s = lax.dot_general(q, k, (((1,), (1,)), ((), ())),
                            preferred_element_type=jnp.float32)          # (TQ, N)
        s = s - jnp.max(s, axis=-1, keepdims=True)
        p = jnp.exp(s)
        p = p * pl.reciprocal(jnp.sum(p, axis=-1, keepdims=True), approx=True)
        p_ref[i] = p
        colsum_ref[...] += jnp.sum(p, axis=0, keepdims=True)             # (1, N)
        return carry

    lax.fori_loop(0, nq, _pass1, 0, unroll=True)

    # Offset normalization factor: exact reciprocal, computed once per batch (hoisted out
    # of the query-tile loop), lane-aligned (1, N).
    inv_col = 1.0 / (1e-9 + colsum_ref[...])

    # ---- pass 2: normalized P @ V, residual, fc_out (+ folded BatchNorm) and ReLU.
    def _pass2(i, carry):
        p = p_ref[i] * inv_col                          # (TQ, N) offset-normalized probs
        out = jnp.dot(p.astype(v.dtype), v,
                      preferred_element_type=jnp.float32)                # (TQ, d_v)
        diff = values_ref[0, i].astype(jnp.float32) - out                # keep residual f32
        o = jnp.dot(diff, wout_ref[...].astype(jnp.float32),
                    preferred_element_type=jnp.float32) + bout_ref[...]
        out_ref[0, i] = jnp.maximum(o, 0.0).astype(out_ref.dtype)
        return carry

    lax.fori_loop(0, nq, _pass2, 0, unroll=True)


# --------------------------------------- wrapper -----------------------------------------
def offset_attention(queries, keys, values, params, *, tq=None, tr=None):
    B, N, d_model = queries.shape
    d_k = params["wq_t"].shape[1]
    d_v = params["wv_t"].shape[1]
    assert d_v == d_model, "values - out requires d_v == d_model (as in the PyTorch module)"
    dtype = queries.dtype
    itemsize = jnp.dtype(dtype).itemsize
    M = B * N
    vmem_limit = _vmem_limit_bytes()

    # Tile choices: 256-row query tiles fill the 256-wide MXU on v6e/v7x (128 would also be
    # fine on v5e); projection row tiles prefer 512 for tall MXU tiles even with small B.
    if tq is None:
        tq = _pick_tile(N, (256, 128))
    if tr is None:
        tr = _pick_tile(M, (512, 256, 128))
    assert tq is not None, f"N={N} must be divisible by a 128/256 query tile"
    assert tr is not None, f"B*N={M} must be divisible by a 128/256/512 row tile"
    nq = N // tq

    # VMEM sanity for the per-batch fused kernel (full-N K/V + cached P tiles).
    est_bytes = (N * N * 4 + N * 4                                   # P cache + colsum
                 + 2 * N * (2 * d_k + d_v + 2 * d_model) * itemsize  # q/k/v/values/out blocks
                 + 2 * (d_v * d_model * itemsize + d_model * 4))     # folded fc_out weights
    assert est_bytes <= vmem_limit, (
        f"fused offset-attention kernel needs ~{est_bytes} B VMEM > budget {vmem_limit} B; "
        "reduce N or implement the tiled online-softmax fallback (see TODO at top)")

    # ---- 1) fused q/k/v projections over flattened (B*N) rows
    full1 = lambda a: pl.BlockSpec(a.shape, lambda i: (0,) * a.ndim)
    row_in = pl.BlockSpec((tr, d_model), lambda i: (i, 0))
    q2, k2, v2 = (x.reshape(M, d_model) for x in (queries, keys, values))
    q_p, k_p, v_p = pl.pallas_call(
        _proj_kernel,
        out_shape=(jax.ShapeDtypeStruct((M, d_k), dtype),
                   jax.ShapeDtypeStruct((M, d_k), dtype),
                   jax.ShapeDtypeStruct((M, d_v), dtype)),
        grid=(M // tr,),
        in_specs=[row_in, row_in, row_in,
                  full1(params["wq_t"]), full1(params["bq"]),
                  full1(params["wk_t"]), full1(params["bk"]),
                  full1(params["wv_t"]), full1(params["bv"])],
        out_specs=(pl.BlockSpec((tr, d_k), lambda i: (i, 0)),
                   pl.BlockSpec((tr, d_k), lambda i: (i, 0)),
                   pl.BlockSpec((tr, d_v), lambda i: (i, 0))),
        compiler_params=pltpu.CompilerParams(
            dimension_semantics=("parallel",), vmem_limit_bytes=vmem_limit),
    )(q2, k2, v2, params["wq_t"], params["bq"], params["wk_t"], params["bk"],
      params["wv_t"], params["bv"])

    q4 = q_p.reshape(B, nq, tq, d_k)
    k3 = k_p.reshape(B, N, d_k)
    v3 = v_p.reshape(B, N, d_v)
    values4 = values.reshape(B, nq, tq, d_model)

    # ---- fold BatchNorm1d (eval) into fc_out: ((x@W)+b)*s + t == x@(W*s) + (b*s + t)
    bn_scale = params["bn_scale"].astype(jnp.float32)
    wout_f = (params["wout_t"].astype(jnp.float32) * bn_scale).astype(dtype)
    bout_f = (params["bout"].astype(jnp.float32) * bn_scale
              + params["bn_shift"].astype(jnp.float32))                  # (1, d_model) f32

    # ---- 2) fused offset-attention + fc_out + ReLU, one grid step per batch
    out4 = pl.pallas_call(
        _fused_attn_kernel,
        out_shape=jax.ShapeDtypeStruct((B, nq, tq, d_model), dtype),
        grid=(B,),
        in_specs=[
            pl.BlockSpec((1, nq, tq, d_k), lambda b: (b, 0, 0, 0)),
            pl.BlockSpec((1, N, d_k), lambda b: (b, 0, 0)),
            pl.BlockSpec((1, N, d_v), lambda b: (b, 0, 0)),
            pl.BlockSpec((1, nq, tq, d_model), lambda b: (b, 0, 0, 0)),
            pl.BlockSpec((d_v, d_model), lambda b: (0, 0)),
            pl.BlockSpec((1, d_model), lambda b: (0, 0)),
        ],
        out_specs=pl.BlockSpec((1, nq, tq, d_model), lambda b: (b, 0, 0, 0)),
        scratch_shapes=[pltpu.VMEM((nq, tq, N), jnp.float32),   # cached softmax tiles
                        pltpu.VMEM((1, N), jnp.float32)],       # column sums
        compiler_params=pltpu.CompilerParams(
            dimension_semantics=("parallel",), vmem_limit_bytes=vmem_limit),
    )(q4, k3, v3, values4, wout_f, bout_f)

    return out4.reshape(B, N, d_model)


def make_params(key, d_model, d_k, d_v, dtype=jnp.float32, std=0.001):
    """Parameters in the PyTorch module layout: nn.Linear weights (out, in) stored
    pre-transposed as (in, out); BatchNorm1d (eval) expressed as per-channel scale/shift
    (folded into fc_out by the wrapper). std=0.001 matches init_weights; the demo passes a
    larger std plus non-zero biases / BN affine so all paths are exercised."""
    ks = jax.random.split(key, 10)
    wq = jax.random.normal(ks[0], (d_k, d_model), dtype) * std
    wk = jax.random.normal(ks[1], (d_k, d_model), dtype) * std
    wv = jax.random.normal(ks[2], (d_v, d_model), dtype) * std
    wout = jax.random.normal(ks[3], (d_model, d_model), dtype) * std
    bq = 0.01 * jax.random.normal(ks[4], (d_k,), dtype)
    bk = 0.01 * jax.random.normal(ks[5], (d_k,), dtype)
    bv = 0.01 * jax.random.normal(ks[6], (d_v,), dtype)
    bout = 0.01 * jax.random.normal(ks[7], (d_model,), dtype)
    eps = 1e-5
    gamma = 1.0 + 0.1 * jax.random.normal(ks[8], (d_model,), dtype)
    beta = 0.1 * jax.random.normal(ks[9], (d_model,), dtype)
    running_mean = jnp.zeros((d_model,), dtype)
    running_var = jnp.ones((d_model,), dtype)
    bn_scale = gamma / jnp.sqrt(running_var + eps)
    bn_shift = beta - running_mean * bn_scale
    return {
        "wq_t": wq.T, "bq": bq.reshape(1, d_k),
        "wk_t": wk.T, "bk": bk.reshape(1, d_k),
        "wv_t": wv.T, "bv": bv.reshape(1, d_v),
        "wout_t": wout.T, "bout": bout.reshape(1, d_model),
        "bn_scale": bn_scale.reshape(1, d_model),
        "bn_shift": bn_shift.reshape(1, d_model),
    }


def offset_attention_ref(queries, keys, values, params):
    """Pure-JAX reference mirroring the PyTorch forward (eval mode), full-f32 matmuls."""
    with jax.default_matmul_precision("highest"):
        q = queries @ params["wq_t"] + params["bq"]
        k = keys @ params["wk_t"] + params["bk"]
        v = values @ params["wv_t"] + params["bv"]
        att = jnp.einsum("bqd,bkd->bqk", q, k)
        att = jax.nn.softmax(att, axis=-1)
        att = att / (1e-9 + jnp.sum(att, axis=1, keepdims=True))
        out = jnp.einsum("bqk,bkd->bqd", att, v)
        o = (values - out) @ params["wout_t"] + params["bout"]
    o = o * params["bn_scale"] + params["bn_shift"]
    return jnp.maximum(o, 0.0)


if __name__ == "__main__":
    # Small but 128-aligned shapes: lane-dense outputs, MXU-friendly, non-trivial normalization.
    B, N, d_model, d_k, d_v = 2, 256, 128, 128, 128   # d_v == d_model required by (values - out)
    key = jax.random.PRNGKey(0)
    kq, kk, kv, kparam = jax.random.split(key, 4)
    queries = jax.random.normal(kq, (B, N, d_model), jnp.float32)
    keys = jax.random.normal(kk, (B, N, d_model), jnp.float32)
    values = jax.random.normal(kv, (B, N, d_model), jnp.float32)
    params = make_params(kparam, d_model, d_k, d_v, std=0.02)  # non-trivial softmax

    out = offset_attention(queries, keys, values, params)
    out = jax.block_until_ready(out)

    ref = offset_attention_ref(queries, keys, values, params)
    assert out.shape == (B, N, d_model)
    # approx softmax-row reciprocal + MXU pass/accumulation differences -> relaxed tolerance.
    assert jnp.allclose(out, ref, rtol=1e-2, atol=1e-2), (
        f"mismatch vs pure-JAX reference, max abs diff={jnp.max(jnp.abs(out - ref))}")
    print("KERNEL_OK")
</pallas_src>

<mosaic_0001>
module attributes {stable_mosaic.version = 11 : i64} {
  func.func @_proj_kernel(%arg0: i32, %arg1: memref<512x128xf32, #tpu.memory_space<vmem>>, %arg2: memref<512x128xf32, #tpu.memory_space<vmem>>, %arg3: memref<512x128xf32, #tpu.memory_space<vmem>>, %arg4: memref<128x128xf32, #tpu.memory_space<vmem>>, %arg5: memref<1x128xf32, #tpu.memory_space<vmem>>, %arg6: memref<128x128xf32, #tpu.memory_space<vmem>>, %arg7: memref<1x128xf32, #tpu.memory_space<vmem>>, %arg8: memref<128x128xf32, #tpu.memory_space<vmem>>, %arg9: memref<1x128xf32, #tpu.memory_space<vmem>>, %arg10: memref<512x128xf32, #tpu.memory_space<vmem>>, %arg11: memref<512x128xf32, #tpu.memory_space<vmem>>, %arg12: memref<512x128xf32, #tpu.memory_space<vmem>>) attributes {dimension_semantics = [#tpu.dimension_semantics<parallel>], iteration_bounds = array<i64: 1>, scalar_prefetch = 0 : i64, scratch_operands = 0 : i64, tpu.core_type = #tpu.core_type<tc>, window_params = [{transform_indices = @transform_0, window_bounds = array<i64: 512, 128>}, {transform_indices = @transform_1, window_bounds = array<i64: 512, 128>}, {transform_indices = @transform_2, window_bounds = array<i64: 512, 128>}, {pipeline_mode = #tpu.pipeline_mode<synchronous>, transform_indices = @transform_3, window_bounds = array<i64: 128, 128>}, {pipeline_mode = #tpu.pipeline_mode<synchronous>, transform_indices = @transform_4, window_bounds = array<i64: 1, 128>}, {pipeline_mode = #tpu.pipeline_mode<synchronous>, transform_indices = @transform_5, window_bounds = array<i64: 128, 128>}, {pipeline_mode = #tpu.pipeline_mode<synchronous>, transform_indices = @transform_6, window_bounds = array<i64: 1, 128>}, {pipeline_mode = #tpu.pipeline_mode<synchronous>, transform_indices = @transform_7, window_bounds = array<i64: 128, 128>}, {pipeline_mode = #tpu.pipeline_mode<synchronous>, transform_indices = @transform_8, window_bounds = array<i64: 1, 128>}, {transform_indices = @transform_9, window_bounds = array<i64: 512, 128>}, {transform_indices = @transform_10, window_bounds = array<i64: 512, 128>}, {transform_indices = @transform_11, window_bounds = array<i64: 512, 128>}]} {
    %c0 = arith.constant 0 : index
    %c0_0 = arith.constant 0 : index
    %0 = vector.load %arg1[%c0, %c0_0] : memref<512x128xf32, #tpu.memory_space<vmem>>, vector<512x128xf32>
    %c0_1 = arith.constant 0 : index
    %c0_2 = arith.constant 0 : index
    %1 = vector.load %arg4[%c0_1, %c0_2] : memref<128x128xf32, #tpu.memory_space<vmem>>, vector<128x128xf32>
    %cst = arith.constant dense<0.000000e+00> : vector<512x128xf32>
    %2 = tpu.matmul %0, %1, %cst {dimension_numbers = #tpu.dot_dimension_numbers<[1], [0], [0], [1], [0, 0, 1, 1], [], []>} : vector<512x128xf32>, vector<128x128xf32>, vector<512x128xf32> -> vector<512x128xf32>
    %c0_3 = arith.constant 0 : index
    %c0_4 = arith.constant 0 : index
    %3 = vector.load %arg5[%c0_3, %c0_4] : memref<1x128xf32, #tpu.memory_space<vmem>>, vector<1x128xf32>
    %4 = vector.broadcast %3 : vector<1x128xf32> to vector<512x128xf32>
    %5 = arith.addf %2, %4 : vector<512x128xf32>
    %c0_5 = arith.constant 0 : index
    %c0_6 = arith.constant 0 : index
    %6 = vector.load %arg10[%c0_5, %c0_6] : memref<512x128xf32, #tpu.memory_space<vmem>>, vector<512x128xf32>
    tpu.vector_store %arg10[%c0_5, %c0_6], %5 {strides = array<i32>} : memref<512x128xf32, #tpu.memory_space<vmem>>, vector<512x128xf32>,
    %c0_7 = arith.constant 0 : index
    %c0_8 = arith.constant 0 : index
    %7 = vector.load %arg2[%c0_7, %c0_8] : memref<512x128xf32, #tpu.memory_space<vmem>>, vector<512x128xf32>
    %c0_9 = arith.constant 0 : index
    %c0_10 = arith.constant 0 : index
    %8 = vector.load %arg6[%c0_9, %c0_10] : memref<128x128xf32, #tpu.memory_space<vmem>>, vector<128x128xf32>
    %cst_11 = arith.constant dense<0.000000e+00> : vector<512x128xf32>
    %9 = tpu.matmul %7, %8, %cst_11 {dimension_numbers = #tpu.dot_dimension_numbers<[1], [0], [0], [1], [0, 0, 1, 1], [], []>} : vector<512x128xf32>, vector<128x128xf32>, vector<512x128xf32> -> vector<512x128xf32>
    %c0_12 = arith.constant 0 : index
    %c0_13 = arith.constant 0 : index
    %10 = vector.load %arg7[%c0_12, %c0_13] : memref<1x128xf32, #tpu.memory_space<vmem>>, vector<1x128xf32>
    %11 = vector.broadcast %10 : vector<1x128xf32> to vector<512x128xf32>
    %12 = arith.addf %9, %11 : vector<512x128xf32>
    %c0_14 = arith.constant 0 : index
    %c0_15 = arith.constant 0 : index
    %13 = vector.load %arg11[%c0_14, %c0_15] : memref<512x128xf32, #tpu.memory_space<vmem>>, vector<512x128xf32>
    tpu.vector_store %arg11[%c0_14, %c0_15], %12 {strides = array<i32>} : memref<512x128xf32, #tpu.memory_space<vmem>>, vector<512x128xf32>,
    %c0_16 = arith.constant 0 : index
    %c0_17 = arith.constant 0 : index
    %14 = vector.load %arg3[%c0_16, %c0_17] : memref<512x128xf32, #tpu.memory_space<vmem>>, vector<512x128xf32>
    %c0_18 = arith.constant 0 : index
    %c0_19 = arith.constant 0 : index
    %15 = vector.load %arg8[%c0_18, %c0_19] : memref<128x128xf32, #tpu.memory_space<vmem>>, vector<128x128xf32>
    %cst_20 = arith.constant dense<0.000000e+00> : vector<512x128xf32>
    %16 = tpu.matmul %14, %15, %cst_20 {dimension_numbers = #tpu.dot_dimension_numbers<[1], [0], [0], [1], [0, 0, 1, 1], [], []>} : vector<512x128xf32>, vector<128x128xf32>, vector<512x128xf32> -> vector<512x128xf32>
    %c0_21 = arith.constant 0 : index
    %c0_22 = arith.constant 0 : index
    %17 = vector.load %arg9[%c0_21, %c0_22] : memref<1x128xf32, #tpu.memory_space<vmem>>, vector<1x128xf32>
    %18 = vector.broadcast %17 : vector<1x128xf32> to vector<512x128xf32>
    %19 = arith.addf %16, %18 : vector<512x128xf32>
    %c0_23 = arith.constant 0 : index
    %c0_24 = arith.constant 0 : index
    %20 = vector.load %arg12[%c0_23, %c0_24] : memref<512x128xf32, #tpu.memory_space<vmem>>, vector<512x128xf32>
    tpu.vector_store %arg12[%c0_23, %c0_24], %19 {strides = array<i32>} : memref<512x128xf32, #tpu.memory_space<vmem>>, vector<512x128xf32>,
    return
  }
  func.func @transform_0(%arg0: i32) -> (i32, i32) {
    %c0_i32 = arith.constant 0 : i32
    %c0_i32_0 = arith.constant 0 : i32
    return %arg0, %c0_i32 : i32, i32
  }
  func.func @transform_1(%arg0: i32) -> (i32, i32) {
    %c0_i32 = arith.constant 0 : i32
    %c0_i32_0 = arith.constant 0 : i32
    return %arg0, %c0_i32 : i32, i32
  }
  func.func @transform_2(%arg0: i32) -> (i32, i32) {
    %c0_i32 = arith.constant 0 : i32
    %c0_i32_0 = arith.constant 0 : i32
    return %arg0, %c0_i32 : i32, i32
  }
  func.func @transform_3(%arg0: i32) -> (i32, i32) {
    %c0_i32 = arith.constant 0 : i32
    %c0_i32_0 = arith.constant 0 : i32
    %c0_i32_1 = arith.constant 0 : i32
    return %c0_i32, %c0_i32_0 : i32, i32
  }
  func.func @transform_4(%arg0: i32) -> (i32, i32) {
    %c0_i32 = arith.constant 0 : i32
    %c0_i32_0 = arith.constant 0 : i32
    %c0_i32_1 = arith.constant 0 : i32
    return %c0_i32, %c0_i32_0 : i32, i32
  }
  func.func @transform_5(%arg0: i32) -> (i32, i32) {
    %c0_i32 = arith.constant 0 : i32
    %c0_i32_0 = arith.constant 0 : i32
    %c0_i32_1 = arith.constant 0 : i32
    return %c0_i32, %c0_i32_0 : i32, i32
  }
  func.func @transform_6(%arg0: i32) -> (i32, i32) {
    %c0_i32 = arith.constant 0 : i32
    %c0_i32_0 = arith.constant 0 : i32
    %c0_i32_1 = arith.constant 0 : i32
    return %c0_i32, %c0_i32_0 : i32, i32
  }
  func.func @transform_7(%arg0: i32) -> (i32, i32) {
    %c0_i32 = arith.constant 0 : i32
    %c0_i32_0 = arith.constant 0 : i32
    %c0_i32_1 = arith.constant 0 : i32
    return %c0_i32, %c0_i32_0 : i32, i32
  }
  func.func @transform_8(%arg0: i32) -> (i32, i32) {
    %c0_i32 = arith.constant 0 : i32
    %c0_i32_0 = arith.constant 0 : i32
    %c0_i32_1 = arith.constant 0 : i32
    return %c0_i32, %c0_i32_0 : i32, i32
  }
  func.func @transform_9(%arg0: i32) -> (i32, i32) {
    %c0_i32 = arith.constant 0 : i32
    %c0_i32_0 = arith.constant 0 : i32
    return %arg0, %c0_i32 : i32, i32
  }
  func.func @transform_10(%arg0: i32) -> (i32, i32) {
    %c0_i32 = arith.constant 0 : i32
    %c0_i32_0 = arith.constant 0 : i32
    return %arg0, %c0_i32 : i32, i32
  }
  func.func @transform_11(%arg0: i32) -> (i32, i32) {
    %c0_i32 = arith.constant 0 : i32
    %c0_i32_0 = arith.constant 0 : i32
    return %arg0, %c0_i32 : i32, i32
  }
}

</mosaic_0001>

<llo_original>
// kernel: tpu_custom_call.1
$region0: #{tpu_custom_call.1}
  #allocation0 [shape = 'u32[]', space=smem, size = 0x4, offset = 0x4, fixed_abs, tag = 'smem constant byte address 0x4 - core index']
  #allocation1 [shape = 'u32[144,128]{1,0:T(1,128)}', space=vmem, size = 0x12000, scoped, tag = 'internal scratch']
  %s0 = inlined_call_operand.hbm [shape: f32[512,128], index: 0, kind: input, shape index: {}]
  %s1 = inlined_call_operand.hbm [shape: f32[512,128], index: 1, kind: input, shape index: {}]
  %s2 = inlined_call_operand.hbm [shape: f32[512,128], index: 2, kind: input, shape index: {}]
  %s3 = inlined_call_operand.hbm [shape: f32[128,128], index: 3, kind: input, shape index: {}]
  %s4 = inlined_call_operand.vmem [shape: f32[1,128], index: 4, kind: input, shape index: {}]
  %s5 = inlined_call_operand.hbm [shape: f32[128,128], index: 5, kind: input, shape index: {}]
  %s6 = inlined_call_operand.vmem [shape: f32[1,128], index: 6, kind: input, shape index: {}]
  %s7 = inlined_call_operand.hbm [shape: f32[128,128], index: 7, kind: input, shape index: {}]
  %s8 = inlined_call_operand.vmem [shape: f32[1,128], index: 8, kind: input, shape index: {}]
  %s9 = inlined_call_operand.hbm [shape: f32[512,128], index: 9, kind: output, shape index: {0}]
  %s10 = inlined_call_operand.hbm [shape: f32[512,128], index: 10, kind: output, shape index: {1}]
  %s11 = inlined_call_operand.hbm [shape: f32[512,128], index: 11, kind: output, shape index: {2}]
  %12 = xla_tuple %s9, %s10, %s11
  %s13 = sld [smem:[#allocation0]]
  $region86: #{tpu_custom_call.1} parent=0
    _
  %s15 = ssub.s32 1, %s13
  %s16 = scalar_select 0, %s15, %s13
  $region1: #{tpu_custom_call.1} parent=0
    #allocation2 [shape = 'u8[262144]{0}', space=vmem, size = 0x40000, scoped, tag = 'input window, operand 0, single buffered']
    #allocation3 [shape = 's32[1]{0}', space=sflag, size = 0x4, scoped, tag = 'scoped memory for tpu_custom_call.1']
    #allocation4 [shape = 's32[1]{0}', space=sflag, size = 0x4, scoped, tag = 'scoped memory for tpu_custom_call.1']
    #allocation5 [shape = 'u8[262144]{0}', space=vmem, size = 0x40000, scoped, tag = 'input window, operand 1, single buffered']
    #allocation6 [shape = 's32[1]{0}', space=sflag, size = 0x4, scoped, tag = 'scoped memory for tpu_custom_call.1']
    #allocation7 [shape = 'u8[262144]{0}', space=vmem, size = 0x40000, scoped, tag = 'input window, operand 2, single buffered']
    #allocation8 [shape = 'u8[65536]{0}', space=vmem, size = 0x10000, scoped, tag = 'input window, operand 3, single buffered']
    #allocation9 [shape = 's32[1]{0}', space=sflag, size = 0x4, scoped, tag = 'scoped memory for tpu_custom_call.1']
    #allocation10 [shape = 'u8[65536]{0}', space=vmem, size = 0x10000, scoped, tag = 'input window, operand 5, single buffered']
    #allocation11 [shape = 'u8[65536]{0}', space=vmem, size = 0x10000, scoped, tag = 'input window, operand 7, single buffered']
    #allocation12 [shape = 's32[1]{0}', space=sflag, size = 0x4, scoped, tag = 'scoped memory for tpu_custom_call.1']
    #allocation13 [shape = 'u8[262144]{0}', space=vmem, size = 0x40000, scoped, tag = 'output window, operand 0, single buffered']
    #allocation14 [shape = 'u8[262144]{0}', space=vmem, size = 0x40000, scoped, tag = 'output window, operand 1, single buffered']
    #allocation15 [shape = 's32[1]{0}', space=sflag, size = 0x4, scoped, tag = 'scoped memory for tpu_custom_call.1']
    #allocation16 [shape = 'u8[262144]{0}', space=vmem, size = 0x40000, scoped, tag = 'output window, operand 2, single buffered']
    %17 = vsyncpa [#allocation3], 0
    %18 = vsyncpa [#allocation6], 0
    %19 = vsyncpa [#allocation9], 0
    %20 = vsyncpa [#allocation12], 0
    %21 = vsyncpa [#allocation4], 0
    %22 = vsyncpa [#allocation15], 0
    // Predicated region
    $region2: #{tpu_custom_call.1} parent=1 // pred_check
      _
    $region3: #{tpu_custom_call.1} parent=1 // pred_check_branch
      %24 = sbr.rel (0) target = $region5
    $region4: #{tpu_custom_call.1} parent=1 // pred_region
      %s26 = ssub.s32 8192, 8192
      %27 = vsyncadd [#allocation3], %s26
      %s28 = sshll.u32 [#allocation2], 4
      %s29 = int_to_ptr.vmem [resolvable:$true] %s28
      %34 = dma.hbm_to_vmem [thread:$0]  %s0, 8192, %s29, [#allocation3], 128, 128, 8
    $region5: #{tpu_custom_call.1} parent=1 // pred_fallthru
      _
    // Predicated region
    $region6: #{tpu_custom_call.1} parent=1 // pred_check
      _
    $region7: #{tpu_custom_call.1} parent=1 // pred_check_branch
      %36 = sbr.rel (0) target = $region9
    $region8: #{tpu_custom_call.1} parent=1 // pred_region
      %s38 = ssub.s32 8192, 8192
      %39 = vsyncadd [#allocation6], %s38
      %s40 = sshll.u32 [#allocation5], 4
      %s41 = int_to_ptr.vmem [resolvable:$true] %s40
      %46 = dma.hbm_to_vmem [thread:$0]  %s1, 8192, %s41, [#allocation6], 128, 128, 8
    $region9: #{tpu_custom_call.1} parent=1 // pred_fallthru
      _
    // Predicated region
    $region10: #{tpu_custom_call.1} parent=1 // pred_check
      _
    $region11: #{tpu_custom_call.1} parent=1 // pred_check_branch
      %48 = sbr.rel (0) target = $region13
    $region12: #{tpu_custom_call.1} parent=1 // pred_region
      %s50 = ssub.s32 8192, 8192
      %51 = vsyncadd [#allocation6], %s50
      %s52 = sshll.u32 [#allocation7], 4
      %s53 = int_to_ptr.vmem [resolvable:$true] %s52
      %58 = dma.hbm_to_vmem [thread:$0]  %s2, 8192, %s53, [#allocation6], 128, 128, 8
    $region13: #{tpu_custom_call.1} parent=1 // pred_fallthru
      _
    // Predicated region
    $region14: #{tpu_custom_call.1} parent=1 // pred_check
      _
    $region15: #{tpu_custom_call.1} parent=1 // pred_check_branch
      %60 = sbr.rel (0) target = $region17
    $region16: #{tpu_custom_call.1} parent=1 // pred_region
      %s62 = ssub.s32 2048, 2048
      %63 = vsyncadd [#allocation9], %s62
      %s64 = sshll.u32 [#allocation8], 4
      %s65 = int_to_ptr.vmem [resolvable:$true] %s64
      %70 = dma.hbm_to_vmem [thread:$0]  %s3, 2048, %s65, [#allocation9], 128, 128, 8
    $region17: #{tpu_custom_call.1} parent=1 // pred_fallthru
      _
    // Predicated region
    $region18: #{tpu_custom_call.1} parent=1 // pred_check
      _
    $region19: #{tpu_custom_call.1} parent=1 // pred_check_branch
      %72 = sbr.rel (0) target = $region21
    $region20: #{tpu_custom_call.1} parent=1 // pred_region
      _
    $region21: #{tpu_custom_call.1} parent=1 // pred_fallthru
      _
    // Predicated region
    $region22: #{tpu_custom_call.1} parent=1 // pred_check
      _
    $region23: #{tpu_custom_call.1} parent=1 // pred_check_branch
      %74 = sbr.rel (0) target = $region25
    $region24: #{tpu_custom_call.1} parent=1 // pred_region
      %s76 = ssub.s32 2048, 2048
      %77 = vsyncadd [#allocation9], %s76
      %s78 = sshll.u32 [#allocation10], 4
      %s79 = int_to_ptr.vmem [resolvable:$true] %s78
      %84 = dma.hbm_to_vmem [thread:$0]  %s5, 2048, %s79, [#allocation9], 128, 128, 8
    $region25: #{tpu_custom_call.1} parent=1 // pred_fallthru
      _
    // Predicated region
    $region26: #{tpu_custom_call.1} parent=1 // pred_check
      _
    $region27: #{tpu_custom_call.1} parent=1 // pred_check_branch
      %86 = sbr.rel (0) target = $region29
    $region28: #{tpu_custom_call.1} parent=1 // pred_region
      _
    $region29: #{tpu_custom_call.1} parent=1 // pred_fallthru
      _
    // Predicated region
    $region30: #{tpu_custom_call.1} parent=1 // pred_check
      _
    $region31: #{tpu_custom_call.1} parent=1 // pred_check_branch
      %88 = sbr.rel (0) target = $region33
    $region32: #{tpu_custom_call.1} parent=1 // pred_region
      %s90 = ssub.s32 2048, 2048
      %91 = vsyncadd [#allocation12], %s90
      %s92 = sshll.u32 [#allocation11], 4
      %s93 = int_to_ptr.vmem [resolvable:$true] %s92
      %98 = dma.hbm_to_vmem [thread:$0]  %s7, 2048, %s93, [#allocation12], 128, 128, 8
    $region33: #{tpu_custom_call.1} parent=1 // pred_fallthru
      _
    // Predicated region
    $region34: #{tpu_custom_call.1} parent=1 // pred_check
      _
    $region35: #{tpu_custom_call.1} parent=1 // pred_check_branch
      %100 = sbr.rel (0) target = $region37
    $region36: #{tpu_custom_call.1} parent=1 // pred_region
      _
    $region37: #{tpu_custom_call.1} parent=1 // pred_fallthru
      _
    // Predicated region
    $region38: #{tpu_custom_call.1} parent=1 // pred_check
      _
    $region39: #{tpu_custom_call.1} parent=1 // pred_check_branch
      %102 = sbr.rel (0) target = $region41
    $region40: #{tpu_custom_call.1} parent=1 // pred_region
      %103 = dma.done [#allocation3], 8192
    $region41: #{tpu_custom_call.1} parent=1 // pred_fallthru
      _
    // Predicated region
    $region42: #{tpu_custom_call.1} parent=1 // pred_check
      _
    $region43: #{tpu_custom_call.1} parent=1 // pred_check_branch
      %105 = sbr.rel (0) target = $region45
    $region44: #{tpu_custom_call.1} parent=1 // pred_region
      %106 = dma.done [#allocation6], 8192
    $region45: #{tpu_custom_call.1} parent=1 // pred_fallthru
      _
    // Predicated region
    $region46: #{tpu_custom_call.1} parent=1 // pred_check
      _
    $region47: #{tpu_custom_call.1} parent=1 // pred_check_branch
      %108 = sbr.rel (0) target = $region49
    $region48: #{tpu_custom_call.1} parent=1 // pred_region
      %109 = dma.done [#allocation6], 8192
    $region49: #{tpu_custom_call.1} parent=1 // pred_fallthru
      _
    // Predicated region
    $region50: #{tpu_custom_call.1} parent=1 // pred_check
      _
    $region51: #{tpu_custom_call.1} parent=1 // pred_check_branch
      %111 = sbr.rel (0) target = $region53
    $region52: #{tpu_custom_call.1} parent=1 // pred_region
      %112 = dma.done [#allocation9], 2048
    $region53: #{tpu_custom_call.1} parent=1 // pred_fallthru
      _
    // Predicated region
    $region54: #{tpu_custom_call.1} parent=1 // pred_check
      _
    $region55: #{tpu_custom_call.1} parent=1 // pred_check_branch
      %114 = sbr.rel (0) target = $region57
    $region56: #{tpu_custom_call.1} parent=1 // pred_region
      %115 = dma.done [#allocation9], 2048
    $region57: #{tpu_custom_call.1} parent=1 // pred_fallthru
      _
    // Predicated region
    $region58: #{tpu_custom_call.1} parent=1 // pred_check
      _
    $region59: #{tpu_custom_call.1} parent=1 // pred_check_branch
      %117 = sbr.rel (0) target = $region61
    $region60: #{tpu_custom_call.1} parent=1 // pred_region
      %118 = dma.done [#allocation12], 2048
    $region61: #{tpu_custom_call.1} parent=1 // pred_fallthru
      _
    %v119 = vld [vmem:[#allocation2] sm:$0xff]
    %v120 = vld [vmem:[#allocation2 + $0x8] sm:$0xff]
    %v121 = vld [vmem:[#allocation2 + $0x10] sm:$0xff]
    %v122 = vld [vmem:[#allocation2 + $0x18] sm:$0xff]
    %v123 = vld [vmem:[#allocation2 + $0x20] sm:$0xff]
    %v124 = vld [vmem:[#allocation2 + $0x28] sm:$0xff]
    %v125 = vld [vmem:[#allocation2 + $0x30] sm:$0xff]
    %v126 = vld [vmem:[#allocation2 + $0x38] sm:$0xff]
    %v127 = vld [vmem:[#allocation2 + $0x40] sm:$0xff]
    %v128 = vld [vmem:[#allocation2 + $0x48] sm:$0xff]
    %v129 = vld [vmem:[#allocation2 + $0x50] sm:$0xff]
    %v130 = vld [vmem:[#allocation2 + $0x58] sm:$0xff]
    %v131 = vld [vmem:[#allocation2 + $0x60] sm:$0xff]
    %v132 = vld [vmem:[#allocation2 + $0x68] sm:$0xff]
    %v133 = vld [vmem:[#allocation2 + $0x70] sm:$0xff]
    %v134 = vld [vmem:[#allocation2 + $0x78] sm:$0xff]
    %v135 = vld [vmem:[#allocation2 + $0x80] sm:$0xff]
    %v136 = vld [vmem:[#allocation2 + $0x88] sm:$0xff]
    %v137 = vld [vmem:[#allocation2 + $0x90] sm:$0xff]
    %v138 = vld [vmem:[#allocation2 + $0x98] sm:$0xff]
    %v139 = vld [vmem:[#allocation2 + $0xa0] sm:$0xff]
    %v140 = vld [vmem:[#allocation2 + $0xa8] sm:$0xff]
    %v141 = vld [vmem:[#allocation2 + $0xb0] sm:$0xff]
    %v142 = vld [vmem:[#allocation2 + $0xb8] sm:$0xff]
    %v143 = vld [vmem:[#allocation2 + $0xc0] sm:$0xff]
    %v144 = vld [vmem:[#allocation2 + $0xc8] sm:$0xff]
    %v145 = vld [vmem:[#allocation2 + $0xd0] sm:$0xff]
    %v146 = vld [vmem:[#allocation2 + $0xd8] sm:$0xff]
    %v147 = vld [vmem:[#allocation2 + $0xe0] sm:$0xff]
    %v148 = vld [vmem:[#allocation2 + $0xe8] sm:$0xff]
    %v149 = vld [vmem:[#allocation2 + $0xf0] sm:$0xff]
    %v150 = vld [vmem:[#allocation2 + $0xf8] sm:$0xff]
    %v151 = vld [vmem:[#allocation2 + $0x100] sm:$0xff]
    %v152 = vld [vmem:[#allocation2 + $0x108] sm:$0xff]
    %v153 = vld [vmem:[#allocation2 + $0x110] sm:$0xff]
    %v154 = vld [vmem:[#allocation2 + $0x118] sm:$0xff]
    %v155 = vld [vmem:[#allocation2 + $0x120] sm:$0xff]
    %v156 = vld [vmem:[#allocation2 + $0x128] sm:$0xff]
    %v157 = vld [vmem:[#allocation2 + $0x130] sm:$0xff]
    %v158 = vld [vmem:[#allocation2 + $0x138] sm:$0xff]
    %v159 = vld [vmem:[#allocation2 + $0x140] sm:$0xff]
    %v160 = vld [vmem:[#allocation2 + $0x148] sm:$0xff]
    %v161 = vld [vmem:[#allocation2 + $0x150] sm:$0xff]
    %v162 = vld [vmem:[#allocation2 + $0x158] sm:$0xff]
    %v163 = vld [vmem:[#allocation2 + $0x160] sm:$0xff]
    %v164 = vld [vmem:[#allocation2 + $0x168] sm:$0xff]
    %v165 = vld [vmem:[#allocation2 + $0x170] sm:$0xff]
    %v166 = vld [vmem:[#allocation2 + $0x178] sm:$0xff]
    %v167 = vld [vmem:[#allocation2 + $0x180] sm:$0xff]
    %v168 = vld [vmem:[#allocation2 + $0x188] sm:$0xff]
    %v169 = vld [vmem:[#allocation2 + $0x190] sm:$0xff]
    %v170 = vld [vmem:[#allocation2 + $0x198] sm:$0xff]
    %v171 = vld [vmem:[#allocation2 + $0x1a0] sm:$0xff]
    %v172 = vld [vmem:[#allocation2 + $0x1a8] sm:$0xff]
    %v173 = vld [vmem:[#allocation2 + $0x1b0] sm:$0xff]
    %v174 = vld [vmem:[#allocation2 + $0x1b8] sm:$0xff]
    %v175 = vld [vmem:[#allocation2 + $0x1c0] sm:$0xff]
    %v176 = vld [vmem:[#allocation2 + $0x1c8] sm:$0xff]
    %v177 = vld [vmem:[#allocation2 + $0x1d0] sm:$0xff]
    %v178 = vld [vmem:[#allocation2 + $0x1d8] sm:$0xff]
    %v179 = vld [vmem:[#allocation2 + $0x1e0] sm:$0xff]
    %v180 = vld [vmem:[#allocation2 + $0x1e8] sm:$0xff]
    %v181 = vld [vmem:[#allocation2 + $0x1f0] sm:$0xff]
    %v182 = vld [vmem:[#allocation2 + $0x1f8] sm:$0xff]
    %v183 = vld [vmem:[#allocation8] sm:$0xff]
    %v184 = vld [vmem:[#allocation8 + $0x8] sm:$0xff]
    %v185 = vld [vmem:[#allocation8 + $0x10] sm:$0xff]
    %v186 = vld [vmem:[#allocation8 + $0x18] sm:$0xff]
    %v187 = vld [vmem:[#allocation8 + $0x20] sm:$0xff]
    %v188 = vld [vmem:[#allocation8 + $0x28] sm:$0xff]
    %v189 = vld [vmem:[#allocation8 + $0x30] sm:$0xff]
    %v190 = vld [vmem:[#allocation8 + $0x38] sm:$0xff]
    %v191 = vld [vmem:[#allocation8 + $0x40] sm:$0xff]
    %v192 = vld [vmem:[#allocation8 + $0x48] sm:$0xff]
    %v193 = vld [vmem:[#allocation8 + $0x50] sm:$0xff]
    %v194 = vld [vmem:[#allocation8 + $0x58] sm:$0xff]
    %v195 = vld [vmem:[#allocation8 + $0x60] sm:$0xff]
    %v196 = vld [vmem:[#allocation8 + $0x68] sm:$0xff]
    %v197 = vld [vmem:[#allocation8 + $0x70] sm:$0xff]
    %v198 = vld [vmem:[#allocation8 + $0x78] sm:$0xff]
    %v199 = vld [vmem:[%s4] sm:$0x1]
    %v201 = vlaneseq
    %v202 = vshrl.u32 %v201, 7
    %v203 = vsub.s32 0, %v202
    %v204 = vrot.slane %v199, %v203
    %206 = vmatprep.subr.mxu0 0.0
    %207 = vmatpush1.msra.mxu0 %v198
    %208 = vmatprep.subr.mxu0 0.0
    %209 = vmatpush1.msra.mxu0 %v197
    %210 = vmatprep.subr.mxu0 0.0
    %211 = vmatpush1.msra.mxu0 %v196
    %212 = vmatprep.subr.mxu0 0.0
    %213 = vmatpush1.msra.mxu0 %v195
    %214 = vmatprep.subr.mxu0 0.0
    %215 = vmatpush1.msra.mxu0 %v194
    %216 = vmatprep.subr.mxu0 0.0
    %217 = vmatpush1.msra.mxu0 %v193
    %218 = vmatprep.subr.mxu0 0.0
    %219 = vmatpush1.msra.mxu0 %v192
    %220 = vmatprep.subr.mxu0 0.0
    %221 = vmatpush1.msra.mxu0 %v191
    %222 = vmatprep.subr.mxu0 0.0
    %223 = vmatpush1.msra.mxu0 %v190
    %224 = vmatprep.subr.mxu0 0.0
    %225 = vmatpush1.msra.mxu0 %v189
    %226 = vmatprep.subr.mxu0 0.0
    %227 = vmatpush1.msra.mxu0 %v188
    %228 = vmatprep.subr.mxu0 0.0
    %229 = vmatpush1.msra.mxu0 %v187
    %230 = vmatprep.subr.mxu0 0.0
    %231 = vmatpush1.msra.mxu0 %v186
    %232 = vmatprep.subr.mxu0 0.0
    %233 = vmatpush1.msra.mxu0 %v185
    %234 = vmatprep.subr.mxu0 0.0
    %235 = vmatpush1.msra.mxu0 %v184
    %236 = vmatprep.subr.mxu0 0.0
    %237 = vmatpush1.msra.mxu0 %v183
    %238 = vmatprep.subr.mxu0 0.0
    %239 = vmatpush2.msra.mxu0 0.0
    %240 = vmatprep.subr.mxu0 0.0
    %241 = vmatpush2.msra.mxu0 0.0
    %242 = vmatprep.subr.mxu0 0.0
    %243 = vmatpush2.msra.mxu0 0.0
    %244 = vmatprep.subr.mxu0 0.0
    %245 = vmatpush2.msra.mxu0 0.0
    %246 = vmatprep.subr.mxu0 0.0
    %247 = vmatpush2.msra.mxu0 0.0
    %248 = vmatprep.subr.mxu0 0.0
    %249 = vmatpush2.msra.mxu0 0.0
    %250 = vmatprep.subr.mxu0 0.0
    %251 = vmatpush2.msra.mxu0 0.0
    %252 = vmatprep.subr.mxu0 0.0
    %253 = vmatpush2.msra.mxu0 0.0
    %254 = vmatprep.subr.mxu0 0.0
    %255 = vmatpush2.msra.mxu0 0.0
    %256 = vmatprep.subr.mxu0 0.0
    %257 = vmatpush2.msra.mxu0 0.0
    %258 = vmatprep.subr.mxu0 0.0
    %259 = vmatpush2.msra.mxu0 0.0
    %260 = vmatprep.subr.mxu0 0.0
    %261 = vmatpush2.msra.mxu0 0.0
    %262 = vmatprep.subr.mxu0 0.0
    %263 = vmatpush2.msra.mxu0 0.0
    %264 = vmatprep.subr.mxu0 0.0
    %265 = vmatpush2.msra.mxu0 0.0
    %266 = vmatprep.subr.mxu0 0.0
    %267 = vmatpush2.msra.mxu0 0.0
    %268 = vmatprep.subr.mxu0 0.0
    %269 = vmatpush2.msra.mxu0 0.0
    %270 = vmatprep.mubr.f32.mxu0 0.0
    %271 = vmatmul.mubr.f32.gmra.mxu0 %v119
    %v272 = vpop.f32.mrf.mxu0
    %v273 = vadd.f32 %v204, %v272
    %v274 = vpop.f32.mrf.mxu0
    %275 = vmatprep.mubr.f32.mxu0 0.0
    %276 = vmatmul.mubr.f32.gmra.mxu0 %v120
    %v277 = vpop.f32.mrf.mxu0
    %v278 = vadd.f32 %v204, %v277
    %v279 = vpop.f32.mrf.mxu0
    %280 = vmatprep.mubr.f32.mxu0 0.0
    %281 = vmatmul.mubr.f32.gmra.mxu0 %v121
    %v282 = vpop.f32.mrf.mxu0
    %v283 = vadd.f32 %v204, %v282
    %v284 = vpop.f32.mrf.mxu0
    %285 = vmatprep.mubr.f32.mxu0 0.0
    %286 = vmatmul.mubr.f32.gmra.mxu0 %v122
    %v287 = vpop.f32.mrf.mxu0
    %v288 = vadd.f32 %v204, %v287
    %v289 = vpop.f32.mrf.mxu0
    %290 = vmatprep.mubr.f32.mxu0 0.0
    %291 = vmatmul.mubr.f32.gmra.mxu0 %v123
    %v292 = vpop.f32.mrf.mxu0
    %v293 = vadd.f32 %v204, %v292
    %v294 = vpop.f32.mrf.mxu0
    %295 = vmatprep.mubr.f32.mxu0 0.0
    %296 = vmatmul.mubr.f32.gmra.mxu0 %v124
    %v297 = vpop.f32.mrf.mxu0
    %v298 = vadd.f32 %v204, %v297
    %v299 = vpop.f32.mrf.mxu0
    %300 = vmatprep.mubr.f32.mxu0 0.0
    %301 = vmatmul.mubr.f32.gmra.mxu0 %v125
    %v302 = vpop.f32.mrf.mxu0
    %v303 = vadd.f32 %v204, %v302
    %v304 = vpop.f32.mrf.mxu0
    %305 = vmatprep.mubr.f32.mxu0 0.0
    %306 = vmatmul.mubr.f32.gmra.mxu0 %v126
    %v307 = vpop.f32.mrf.mxu0
    %v308 = vadd.f32 %v204, %v307
    %v309 = vpop.f32.mrf.mxu0
    %310 = vmatprep.mubr.f32.mxu0 0.0
    %311 = vmatmul.mubr.f32.gmra.mxu0 %v127
    %v312 = vpop.f32.mrf.mxu0
    %v313 = vadd.f32 %v204, %v312
    %v314 = vpop.f32.mrf.mxu0
    %315 = vmatprep.mubr.f32.mxu0 0.0
    %316 = vmatmul.mubr.f32.gmra.mxu0 %v128
    %v317 = vpop.f32.mrf.mxu0
    %v318 = vadd.f32 %v204, %v317
    %v319 = vpop.f32.mrf.mxu0
    %320 = vmatprep.mubr.f32.mxu0 0.0
    %321 = vmatmul.mubr.f32.gmra.mxu0 %v129
    %v322 = vpop.f32.mrf.mxu0
    %v323 = vadd.f32 %v204, %v322
    %v324 = vpop.f32.mrf.mxu0
    %325 = vmatprep.mubr.f32.mxu0 0.0
    %326 = vmatmul.mubr.f32.gmra.mxu0 %v130
    %v327 = vpop.f32.mrf.mxu0
    %v328 = vadd.f32 %v204, %v327
    %v329 = vpop.f32.mrf.mxu0
    %330 = vmatprep.mubr.f32.mxu0 0.0
    %331 = vmatmul.mubr.f32.gmra.mxu0 %v131
    %v332 = vpop.f32.mrf.mxu0
    %v333 = vadd.f32 %v204, %v332
    %v334 = vpop.f32.mrf.mxu0
    %335 = vmatprep.mubr.f32.mxu0 0.0
    %336 = vmatmul.mubr.f32.gmra.mxu0 %v132
    %v337 = vpop.f32.mrf.mxu0
    %v338 = vadd.f32 %v204, %v337
    %v339 = vpop.f32.mrf.mxu0
    %340 = vmatprep.mubr.f32.mxu0 0.0
    %341 = vmatmul.mubr.f32.gmra.mxu0 %v133
    %v342 = vpop.f32.mrf.mxu0
    %v343 = vadd.f32 %v204, %v342
    %v344 = vpop.f32.mrf.mxu0
    %345 = vmatprep.mubr.f32.mxu0 0.0
    %346 = vmatmul.mubr.f32.gmra.mxu0 %v134
    %v347 = vpop.f32.mrf.mxu0
    %v348 = vadd.f32 %v204, %v347
    %v349 = vpop.f32.mrf.mxu0
    %350 = vmatprep.mubr.f32.mxu0 0.0
    %351 = vmatmul.mubr.f32.gmra.mxu0 %v135
    %v352 = vpop.f32.mrf.mxu0
    %v353 = vadd.f32 %v204, %v352
    %v354 = vpop.f32.mrf.mxu0
    %355 = vmatprep.mubr.f32.mxu0 0.0
    %356 = vmatmul.mubr.f32.gmra.mxu0 %v136
    %v357 = vpop.f32.mrf.mxu0
    %v358 = vadd.f32 %v204, %v357
    %v359 = vpop.f32.mrf.mxu0
    %360 = vmatprep.mubr.f32.mxu0 0.0
    %361 = vmatmul.mubr.f32.gmra.mxu0 %v137
    %v362 = vpop.f32.mrf.mxu0
    %v363 = vadd.f32 %v204, %v362
    %v364 = vpop.f32.mrf.mxu0
    %365 = vmatprep.mubr.f32.mxu0 0.0
    %366 = vmatmul.mubr.f32.gmra.mxu0 %v138
    %v367 = vpop.f32.mrf.mxu0
    %v368 = vadd.f32 %v204, %v367
    %v369 = vpop.f32.mrf.mxu0
    %370 = vmatprep.mubr.f32.mxu0 0.0
    %371 = vmatmul.mubr.f32.gmra.mxu0 %v139
    %v372 = vpop.f32.mrf.mxu0
    %v373 = vadd.f32 %v204, %v372
    %v374 = vpop.f32.mrf.mxu0
    %375 = vmatprep.mubr.f32.mxu0 0.0
    %376 = vmatmul.mubr.f32.gmra.mxu0 %v140
    %v377 = vpop.f32.mrf.mxu0
    %v378 = vadd.f32 %v204, %v377
    %v379 = vpop.f32.mrf.mxu0
    %380 = vmatprep.mubr.f32.mxu0 0.0
    %381 = vmatmul.mubr.f32.gmra.mxu0 %v141
    %v382 = vpop.f32.mrf.mxu0
    %v383 = vadd.f32 %v204, %v382
    %v384 = vpop.f32.mrf.mxu0
    %385 = vmatprep.mubr.f32.mxu0 0.0
    %386 = vmatmul.mubr.f32.gmra.mxu0 %v142
    %v387 = vpop.f32.mrf.mxu0
    %v388 = vadd.f32 %v204, %v387
    %v389 = vpop.f32.mrf.mxu0
    %390 = vmatprep.mubr.f32.mxu0 0.0
    %391 = vmatmul.mubr.f32.gmra.mxu0 %v143
    %v392 = vpop.f32.mrf.mxu0
    %v393 = vadd.f32 %v204, %v392
    %v394 = vpop.f32.mrf.mxu0
    %395 = vmatprep.mubr.f32.mxu0 0.0
    %396 = vmatmul.mubr.f32.gmra.mxu0 %v144
    %v397 = vpop.f32.mrf.mxu0
    %v398 = vadd.f32 %v204, %v397
    %v399 = vpop.f32.mrf.mxu0
    %400 = vmatprep.mubr.f32.mxu0 0.0
    %401 = vmatmul.mubr.f32.gmra.mxu0 %v145
    %v402 = vpop.f32.mrf.mxu0
    %v403 = vadd.f32 %v204, %v402
    %v404 = vpop.f32.mrf.mxu0
    %405 = vmatprep.mubr.f32.mxu0 0.0
    %406 = vmatmul.mubr.f32.gmra.mxu0 %v146
    %v407 = vpop.f32.mrf.mxu0
    %v408 = vadd.f32 %v204, %v407
    %v409 = vpop.f32.mrf.mxu0
    %410 = vmatprep.mubr.f32.mxu0 0.0
    %411 = vmatmul.mubr.f32.gmra.mxu0 %v147
    %v412 = vpop.f32.mrf.mxu0
    %v413 = vadd.f32 %v204, %v412
    %v414 = vpop.f32.mrf.mxu0
    %415 = vmatprep.mubr.f32.mxu0 0.0
    %416 = vmatmul.mubr.f32.gmra.mxu0 %v148
    %v417 = vpop.f32.mrf.mxu0
    %v418 = vadd.f32 %v204, %v417
    %v419 = vpop.f32.mrf.mxu0
    %420 = vmatprep.mubr.f32.mxu0 0.0
    %421 = vmatmul.mubr.f32.gmra.mxu0 %v149
    %v422 = vpop.f32.mrf.mxu0
    %v423 = vadd.f32 %v204, %v422
    %v424 = vpop.f32.mrf.mxu0
    %425 = vmatprep.mubr.f32.mxu0 0.0
    %426 = vmatmul.mubr.f32.gmra.mxu0 %v150
    %v427 = vpop.f32.mrf.mxu0
    %v428 = vadd.f32 %v204, %v427
    %v429 = vpop.f32.mrf.mxu0
    %430 = vmatprep.mubr.f32.mxu0 0.0
    %431 = vmatmul.mubr.f32.gmra.mxu0 %v151
    %v432 = vpop.f32.mrf.mxu0
    %v433 = vadd.f32 %v204, %v432
    %v434 = vpop.f32.mrf.mxu0
    %435 = vmatprep.mubr.f32.mxu0 0.0
    %436 = vmatmul.mubr.f32.gmra.mxu0 %v152
    %v437 = vpop.f32.mrf.mxu0
    %v438 = vadd.f32 %v204, %v437
    %v439 = vpop.f32.mrf.mxu0
    %440 = vmatprep.mubr.f32.mxu0 0.0
    %441 = vmatmul.mubr.f32.gmra.mxu0 %v153
    %v442 = vpop.f32.mrf.mxu0
    %v443 = vadd.f32 %v204, %v442
    %v444 = vpop.f32.mrf.mxu0
    %445 = vmatprep.mubr.f32.mxu0 0.0
    %446 = vmatmul.mubr.f32.gmra.mxu0 %v154
    %v447 = vpop.f32.mrf.mxu0
    %v448 = vadd.f32 %v204, %v447
    %v449 = vpop.f32.mrf.mxu0
    %450 = vmatprep.mubr.f32.mxu0 0.0
    %451 = vmatmul.mubr.f32.gmra.mxu0 %v155
    %v452 = vpop.f32.mrf.mxu0
    %v453 = vadd.f32 %v204, %v452
    %v454 = vpop.f32.mrf.mxu0
    %455 = vmatprep.mubr.f32.mxu0 0.0
    %456 = vmatmul.mubr.f32.gmra.mxu0 %v156
    %v457 = vpop.f32.mrf.mxu0
    %v458 = vadd.f32 %v204, %v457
    %v459 = vpop.f32.mrf.mxu0
    %460 = vmatprep.mubr.f32.mxu0 0.0
    %461 = vmatmul.mubr.f32.gmra.mxu0 %v157
    %v462 = vpop.f32.mrf.mxu0
    %v463 = vadd.f32 %v204, %v462
    %v464 = vpop.f32.mrf.mxu0
    %465 = vmatprep.mubr.f32.mxu0 0.0
    %466 = vmatmul.mubr.f32.gmra.mxu0 %v158
    %v467 = vpop.f32.mrf.mxu0
    %v468 = vadd.f32 %v204, %v467
    %v469 = vpop.f32.mrf.mxu0
    %470 = vmatprep.mubr.f32.mxu0 0.0
    %471 = vmatmul.mubr.f32.gmra.mxu0 %v159
    %v472 = vpop.f32.mrf.mxu0
    %v473 = vadd.f32 %v204, %v472
    %v474 = vpop.f32.mrf.mxu0
    %475 = vmatprep.mubr.f32.mxu0 0.0
    %476 = vmatmul.mubr.f32.gmra.mxu0 %v160
    %v477 = vpop.f32.mrf.mxu0
    %v478 = vadd.f32 %v204, %v477
    %v479 = vpop.f32.mrf.mxu0
    %480 = vmatprep.mubr.f32.mxu0 0.0
    %481 = vmatmul.mubr.f32.gmra.mxu0 %v161
    %v482 = vpop.f32.mrf.mxu0
    %v483 = vadd.f32 %v204, %v482
    %v484 = vpop.f32.mrf.mxu0
    %485 = vmatprep.mubr.f32.mxu0 0.0
    %486 = vmatmul.mubr.f32.gmra.mxu0 %v162
    %v487 = vpop.f32.mrf.mxu0
    %v488 = vadd.f32 %v204, %v487
    %v489 = vpop.f32.mrf.mxu0
    %490 = vmatprep.mubr.f32.mxu0 0.0
    %491 = vmatmul.mubr.f32.gmra.mxu0 %v163
    %v492 = vpop.f32.mrf.mxu0
    %v493 = vadd.f32 %v204, %v492
    %v494 = vpop.f32.mrf.mxu0
    %495 = vmatprep.mubr.f32.mxu0 0.0
    %496 = vmatmul.mubr.f32.gmra.mxu0 %v164
    %v497 = vpop.f32.mrf.mxu0
    %v498 = vadd.f32 %v204, %v497
    %v499 = vpop.f32.mrf.mxu0
    %500 = vmatprep.mubr.f32.mxu0 0.0
    %501 = vmatmul.mubr.f32.gmra.mxu0 %v165
    %v502 = vpop.f32.mrf.mxu0
    %v503 = vadd.f32 %v204, %v502
    %v504 = vpop.f32.mrf.mxu0
    %505 = vmatprep.mubr.f32.mxu0 0.0
    %506 = vmatmul.mubr.f32.gmra.mxu0 %v166
    %v507 = vpop.f32.mrf.mxu0
    %v508 = vadd.f32 %v204, %v507
    %v509 = vpop.f32.mrf.mxu0
    %510 = vmatprep.mubr.f32.mxu0 0.0
    %511 = vmatmul.mubr.f32.gmra.mxu0 %v167
    %v512 = vpop.f32.mrf.mxu0
    %v513 = vadd.f32 %v204, %v512
    %v514 = vpop.f32.mrf.mxu0
    %515 = vmatprep.mubr.f32.mxu0 0.0
    %516 = vmatmul.mubr.f32.gmra.mxu0 %v168
    %v517 = vpop.f32.mrf.mxu0
    %v518 = vadd.f32 %v204, %v517
    %v519 = vpop.f32.mrf.mxu0
    %520 = vmatprep.mubr.f32.mxu0 0.0
    %521 = vmatmul.mubr.f32.gmra.mxu0 %v169
    %v522 = vpop.f32.mrf.mxu0
    %v523 = vadd.f32 %v204, %v522
    %v524 = vpop.f32.mrf.mxu0
    %525 = vmatprep.mubr.f32.mxu0 0.0
    %526 = vmatmul.mubr.f32.gmra.mxu0 %v170
    %v527 = vpop.f32.mrf.mxu0
    %v528 = vadd.f32 %v204, %v527
    %v529 = vpop.f32.mrf.mxu0
    %530 = vmatprep.mubr.f32.mxu0 0.0
    %531 = vmatmul.mubr.f32.gmra.mxu0 %v171
    %v532 = vpop.f32.mrf.mxu0
    %v533 = vadd.f32 %v204, %v532
    %v534 = vpop.f32.mrf.mxu0
    %535 = vmatprep.mubr.f32.mxu0 0.0
    %536 = vmatmul.mubr.f32.gmra.mxu0 %v172
    %v537 = vpop.f32.mrf.mxu0
    %v538 = vadd.f32 %v204, %v537
    %v539 = vpop.f32.mrf.mxu0
    %540 = vmatprep.mubr.f32.mxu0 0.0
    %541 = vmatmul.mubr.f32.gmra.mxu0 %v173
    %v542 = vpop.f32.mrf.mxu0
    %v543 = vadd.f32 %v204, %v542
    %v544 = vpop.f32.mrf.mxu0
    %545 = vmatprep.mubr.f32.mxu0 0.0
    %546 = vmatmul.mubr.f32.gmra.mxu0 %v174
    %v547 = vpop.f32.mrf.mxu0
    %v548 = vadd.f32 %v204, %v547
    %v549 = vpop.f32.mrf.mxu0
    %550 = vmatprep.mubr.f32.mxu0 0.0
    %551 = vmatmul.mubr.f32.gmra.mxu0 %v175
    %v552 = vpop.f32.mrf.mxu0
    %v553 = vadd.f32 %v204, %v552
    %v554 = vpop.f32.mrf.mxu0
    %555 = vmatprep.mubr.f32.mxu0 0.0
    %556 = vmatmul.mubr.f32.gmra.mxu0 %v176
    %v557 = vpop.f32.mrf.mxu0
    %v558 = vadd.f32 %v204, %v557
    %v559 = vpop.f32.mrf.mxu0
    %560 = vmatprep.mubr.f32.mxu0 0.0
    %561 = vmatmul.mubr.f32.gmra.mxu0 %v177
    %v562 = vpop.f32.mrf.mxu0
    %v563 = vadd.f32 %v204, %v562
    %v564 = vpop.f32.mrf.mxu0
    %565 = vmatprep.mubr.f32.mxu0 0.0
    %566 = vmatmul.mubr.f32.gmra.mxu0 %v178
    %v567 = vpop.f32.mrf.mxu0
    %v568 = vadd.f32 %v204, %v567
    %v569 = vpop.f32.mrf.mxu0
    %570 = vmatprep.mubr.f32.mxu0 0.0
    %571 = vmatmul.mubr.f32.gmra.mxu0 %v179
    %v572 = vpop.f32.mrf.mxu0
    %v573 = vadd.f32 %v204, %v572
    %v574 = vpop.f32.mrf.mxu0
    %575 = vmatprep.mubr.f32.mxu0 0.0
    %576 = vmatmul.mubr.f32.gmra.mxu0 %v180
    %v577 = vpop.f32.mrf.mxu0
    %v578 = vadd.f32 %v204, %v577
    %v579 = vpop.f32.mrf.mxu0
    %580 = vmatprep.mubr.f32.mxu0 0.0
    %581 = vmatmul.mubr.f32.gmra.mxu0 %v181
    %v582 = vpop.f32.mrf.mxu0
    %v583 = vadd.f32 %v204, %v582
    %v584 = vpop.f32.mrf.mxu0
    %585 = vmatprep.mubr.f32.mxu0 0.0
    %586 = vmatmul.mubr.f32.gmra.mxu0 %v182
    %v587 = vpop.f32.mrf.mxu0
    %v588 = vadd.f32 %v204, %v587
    %v589 = vpop.f32.mrf.mxu0
    %590 = vdwg.mxu0
    %591 = vst [vmem:[#allocation13] sm:$0xff] %v273
    %592 = vst [vmem:[#allocation13 + $0x8] sm:$0xff] %v278
    %593 = vst [vmem:[#allocation13 + $0x10] sm:$0xff] %v283
    %594 = vst [vmem:[#allocation13 + $0x18] sm:$0xff] %v288
    %595 = vst [vmem:[#allocation13 + $0x20] sm:$0xff] %v293
    %596 = vst [vmem:[#allocation13 + $0x28] sm:$0xff] %v298
    %597 = vst [vmem:[#allocation13 + $0x30] sm:$0xff] %v303
    %598 = vst [vmem:[#allocation13 + $0x38] sm:$0xff] %v308
    %599 = vst [vmem:[#allocation13 + $0x40] sm:$0xff] %v313
    %600 = vst [vmem:[#allocation13 + $0x48] sm:$0xff] %v318
    %601 = vst [vmem:[#allocation13 + $0x50] sm:$0xff] %v323
    %602 = vst [vmem:[#allocation13 + $0x58] sm:$0xff] %v328
    %603 = vst [vmem:[#allocation13 + $0x60] sm:$0xff] %v333
    %604 = vst [vmem:[#allocation13 + $0x68] sm:$0xff] %v338
    %605 = vst [vmem:[#allocation13 + $0x70] sm:$0xff] %v343
    %606 = vst [vmem:[#allocation13 + $0x78] sm:$0xff] %v348
    %607 = vst [vmem:[#allocation13 + $0x80] sm:$0xff] %v353
    %608 = vst [vmem:[#allocation13 + $0x88] sm:$0xff] %v358
    %609 = vst [vmem:[#allocation13 + $0x90] sm:$0xff] %v363
    %610 = vst [vmem:[#allocation13 + $0x98] sm:$0xff] %v368
    %611 = vst [vmem:[#allocation13 + $0xa0] sm:$0xff] %v373
    %612 = vst [vmem:[#allocation13 + $0xa8] sm:$0xff] %v378
    %613 = vst [vmem:[#allocation13 + $0xb0] sm:$0xff] %v383
    %614 = vst [vmem:[#allocation13 + $0xb8] sm:$0xff] %v388
    %615 = vst [vmem:[#allocation13 + $0xc0] sm:$0xff] %v393
    %616 = vst [vmem:[#allocation13 + $0xc8] sm:$0xff] %v398
    %617 = vst [vmem:[#allocation13 + $0xd0] sm:$0xff] %v403
    %618 = vst [vmem:[#allocation13 + $0xd8] sm:$0xff] %v408
    %619 = vst [vmem:[#allocation13 + $0xe0] sm:$0xff] %v413
    %620 = vst [vmem:[#allocation13 + $0xe8] sm:$0xff] %v418
    %621 = vst [vmem:[#allocation13 + $0xf0] sm:$0xff] %v423
    %622 = vst [vmem:[#allocation13 + $0xf8] sm:$0xff] %v428
    %623 = vst [vmem:[#allocation13 + $0x100] sm:$0xff] %v433
    %624 = vst [vmem:[#allocation13 + $0x108] sm:$0xff] %v438
    %625 = vst [vmem:[#allocation13 + $0x110] sm:$0xff] %v443
    %626 = vst [vmem:[#allocation13 + $0x118] sm:$0xff] %v448
    %627 = vst [vmem:[#allocation13 + $0x120] sm:$0xff] %v453
    %628 = vst [vmem:[#allocation13 + $0x128] sm:$0xff] %v458
    %629 = vst [vmem:[#allocation13 + $0x130] sm:$0xff] %v463
    %630 = vst [vmem:[#allocation13 + $0x138] sm:$0xff] %v468
    %631 = vst [vmem:[#allocation13 + $0x140] sm:$0xff] %v473
    %632 = vst [vmem:[#allocation13 + $0x148] sm:$0xff] %v478
    %633 = vst [vmem:[#allocation13 + $0x150] sm:$0xff] %v483
    %634 = vst [vmem:[#allocation13 + $0x158] sm:$0xff] %v488
    %635 = vst [vmem:[#allocation13 + $0x160] sm:$0xff] %v493
    %636 = vst [vmem:[#allocation13 + $0x168] sm:$0xff] %v498
    %637 = vst [vmem:[#allocation13 + $0x170] sm:$0xff] %v503
    %638 = vst [vmem:[#allocation13 + $0x178] sm:$0xff] %v508
    %639 = vst [vmem:[#allocation13 + $0x180] sm:$0xff] %v513
    %640 = vst [vmem:[#allocation13 + $0x188] sm:$0xff] %v518
    %641 = vst [vmem:[#allocation13 + $0x190] sm:$0xff] %v523
    %642 = vst [vmem:[#allocation13 + $0x198] sm:$0xff] %v528
    %643 = vst [vmem:[#allocation13 + $0x1a0] sm:$0xff] %v533
    %644 = vst [vmem:[#allocation13 + $0x1a8] sm:$0xff] %v538
    %645 = vst [vmem:[#allocation13 + $0x1b0] sm:$0xff] %v543
    %646 = vst [vmem:[#allocation13 + $0x1b8] sm:$0xff] %v548
    %647 = vst [vmem:[#allocation13 + $0x1c0] sm:$0xff] %v553
    %648 = vst [vmem:[#allocation13 + $0x1c8] sm:$0xff] %v558
    %649 = vst [vmem:[#allocation13 + $0x1d0] sm:$0xff] %v563
    %650 = vst [vmem:[#allocation13 + $0x1d8] sm:$0xff] %v568
    %651 = vst [vmem:[#allocation13 + $0x1e0] sm:$0xff] %v573
    %652 = vst [vmem:[#allocation13 + $0x1e8] sm:$0xff] %v578
    %653 = vst [vmem:[#allocation13 + $0x1f0] sm:$0xff] %v583
    %654 = vst [vmem:[#allocation13 + $0x1f8] sm:$0xff] %v588
    %v655 = vld [vmem:[#allocation5] sm:$0xff]
    %v656 = vld [vmem:[#allocation5 + $0x8] sm:$0xff]
    %v657 = vld [vmem:[#allocation5 + $0x10] sm:$0xff]
    %v658 = vld [vmem:[#allocation5 + $0x18] sm:$0xff]
    %v659 = vld [vmem:[#allocation5 + $0x20] sm:$0xff]
    %v660 = vld [vmem:[#allocation5 + $0x28] sm:$0xff]
    %v661 = vld [vmem:[#allocation5 + $0x30] sm:$0xff]
    %v662 = vld [vmem:[#allocation5 + $0x38] sm:$0xff]
    %v663 = vld [vmem:[#allocation5 + $0x40] sm:$0xff]
    %v664 = vld [vmem:[#allocation5 + $0x48] sm:$0xff]
    %v665 = vld [vmem:[#allocation5 + $0x50] sm:$0xff]
    %v666 = vld [vmem:[#allocation5 + $0x58] sm:$0xff]
    %v667 = vld [vmem:[#allocation5 + $0x60] sm:$0xff]
    %v668 = vld [vmem:[#allocation5 + $0x68] sm:$0xff]
    %v669 = vld [vmem:[#allocation5 + $0x70] sm:$0xff]
    %v670 = vld [vmem:[#allocation5 + $0x78] sm:$0xff]
    %v671 = vld [vmem:[#allocation5 + $0x80] sm:$0xff]
    %v672 = vld [vmem:[#allocation5 + $0x88] sm:$0xff]
    %v673 = vld [vmem:[#allocation5 + $0x90] sm:$0xff]
    %v674 = vld [vmem:[#allocation5 + $0x98] sm:$0xff]
    %v675 = vld [vmem:[#allocation5 + $0xa0] sm:$0xff]
    %v676 = vld [vmem:[#allocation5 + $0xa8] sm:$0xff]
    %v677 = vld [vmem:[#allocation5 + $0xb0] sm:$0xff]
    %v678 = vld [vmem:[#allocation5 + $0xb8] sm:$0xff]
    %v679 = vld [vmem:[#allocation5 + $0xc0] sm:$0xff]
    %v680 = vld [vmem:[#allocation5 + $0xc8] sm:$0xff]
    %v681 = vld [vmem:[#allocation5 + $0xd0] sm:$0xff]
    %v682 = vld [vmem:[#allocation5 + $0xd8] sm:$0xff]
    %v683 = vld [vmem:[#allocation5 + $0xe0] sm:$0xff]
    %v684 = vld [vmem:[#allocation5 + $0xe8] sm:$0xff]
    %v685 = vld [vmem:[#allocation5 + $0xf0] sm:$0xff]
    %v686 = vld [vmem:[#allocation5 + $0xf8] sm:$0xff]
    %v687 = vld [vmem:[#allocation5 + $0x100] sm:$0xff]
    %v688 = vld [vmem:[#allocation5 + $0x108] sm:$0xff]
    %v689 = vld [vmem:[#allocation5 + $0x110] sm:$0xff]
    %v690 = vld [vmem:[#allocation5 + $0x118] sm:$0xff]
    %v691 = vld [vmem:[#allocation5 + $0x120] sm:$0xff]
    %v692 = vld [vmem:[#allocation5 + $0x128] sm:$0xff]
    %v693 = vld [vmem:[#allocation5 + $0x130] sm:$0xff]
    %v694 = vld [vmem:[#allocation5 + $0x138] sm:$0xff]
    %v695 = vld [vmem:[#allocation5 + $0x140] sm:$0xff]
    %v696 = vld [vmem:[#allocation5 + $0x148] sm:$0xff]
    %v697 = vld [vmem:[#allocation5 + $0x150] sm:$0xff]
    %v698 = vld [vmem:[#allocation5 + $0x158] sm:$0xff]
    %v699 = vld [vmem:[#allocation5 + $0x160] sm:$0xff]
    %v700 = vld [vmem:[#allocation5 + $0x168] sm:$0xff]
    %v701 = vld [vmem:[#allocation5 + $0x170] sm:$0xff]
    %v702 = vld [vmem:[#allocation5 + $0x178] sm:$0xff]
    %v703 = vld [vmem:[#allocation5 + $0x180] sm:$0xff]
    %v704 = vld [vmem:[#allocation5 + $0x188] sm:$0xff]
    %v705 = vld [vmem:[#allocation5 + $0x190] sm:$0xff]
    %v706 = vld [vmem:[#allocation5 + $0x198] sm:$0xff]
    %v707 = vld [vmem:[#allocation5 + $0x1a0] sm:$0xff]
    %v708 = vld [vmem:[#allocation5 + $0x1a8] sm:$0xff]
    %v709 = vld [vmem:[#allocation5 + $0x1b0] sm:$0xff]
    %v710 = vld [vmem:[#allocation5 + $0x1b8] sm:$0xff]
    %v711 = vld [vmem:[#allocation5 + $0x1c0] sm:$0xff]
    %v712 = vld [vmem:[#allocation5 + $0x1c8] sm:$0xff]
    %v713 = vld [vmem:[#allocation5 + $0x1d0] sm:$0xff]
    %v714 = vld [vmem:[#allocation5 + $0x1d8] sm:$0xff]
    %v715 = vld [vmem:[#allocation5 + $0x1e0] sm:$0xff]
    %v716 = vld [vmem:[#allocation5 + $0x1e8] sm:$0xff]
    %v717 = vld [vmem:[#allocation5 + $0x1f0] sm:$0xff]
    %v718 = vld [vmem:[#allocation5 + $0x1f8] sm:$0xff]
    %v719 = vld [vmem:[#allocation10] sm:$0xff]
    %v720 = vld [vmem:[#allocation10 + $0x8] sm:$0xff]
    %v721 = vld [vmem:[#allocation10 + $0x10] sm:$0xff]
    %v722 = vld [vmem:[#allocation10 + $0x18] sm:$0xff]
    %v723 = vld [vmem:[#allocation10 + $0x20] sm:$0xff]
    %v724 = vld [vmem:[#allocation10 + $0x28] sm:$0xff]
    %v725 = vld [vmem:[#allocation10 + $0x30] sm:$0xff]
    %v726 = vld [vmem:[#allocation10 + $0x38] sm:$0xff]
    %v727 = vld [vmem:[#allocation10 + $0x40] sm:$0xff]
    %v728 = vld [vmem:[#allocation10 + $0x48] sm:$0xff]
    %v729 = vld [vmem:[#allocation10 + $0x50] sm:$0xff]
    %v730 = vld [vmem:[#allocation10 + $0x58] sm:$0xff]
    %v731 = vld [vmem:[#allocation10 + $0x60] sm:$0xff]
    %v732 = vld [vmem:[#allocation10 + $0x68] sm:$0xff]
    %v733 = vld [vmem:[#allocation10 + $0x70] sm:$0xff]
    %v734 = vld [vmem:[#allocation10 + $0x78] sm:$0xff]
    %v735 = vld [vmem:[%s6] sm:$0x1]
    %v737 = vlaneseq
    %v738 = vshrl.u32 %v737, 7
    %v739 = vsub.s32 0, %v738
    %v740 = vrot.slane %v735, %v739
    %742 = vmatprep.subr.mxu0 0.0
    %743 = vmatpush1.msra.mxu0 %v734
    %744 = vmatprep.subr.mxu0 0.0
    %745 = vmatpush1.msra.mxu0 %v733
    %746 = vmatprep.subr.mxu0 0.0
    %747 = vmatpush1.msra.mxu0 %v732
    %748 = vmatprep.subr.mxu0 0.0
    %749 = vmatpush1.msra.mxu0 %v731
    %750 = vmatprep.subr.mxu0 0.0
    %751 = vmatpush1.msra.mxu0 %v730
    %752 = vmatprep.subr.mxu0 0.0
    %753 = vmatpush1.msra.mxu0 %v729
    %754 = vmatprep.subr.mxu0 0.0
    %755 = vmatpush1.msra.mxu0 %v728
    %756 = vmatprep.subr.mxu0 0.0
    %757 = vmatpush1.msra.mxu0 %v727
    %758 = vmatprep.subr.mxu0 0.0
    %759 = vmatpush1.msra.mxu0 %v726
    %760 = vmatprep.subr.mxu0 0.0
    %761 = vmatpush1.msra.mxu0 %v725
    %762 = vmatprep.subr.mxu0 0.0
    %763 = vmatpush1.msra.mxu0 %v724
    %764 = vmatprep.subr.mxu0 0.0
    %765 = vmatpush1.msra.mxu0 %v723
    %766 = vmatprep.subr.mxu0 0.0
    %767 = vmatpush1.msra.mxu0 %v722
    %768 = vmatprep.subr.mxu0 0.0
    %769 = vmatpush1.msra.mxu0 %v721
    %770 = vmatprep.subr.mxu0 0.0
    %771 = vmatpush1.msra.mxu0 %v720
    %772 = vmatprep.subr.mxu0 0.0
    %773 = vmatpush1.msra.mxu0 %v719
    %774 = vmatprep.subr.mxu0 0.0
    %775 = vmatpush2.msra.mxu0 0.0
    %776 = vmatprep.subr.mxu0 0.0
    %777 = vmatpush2.msra.mxu0 0.0
    %778 = vmatprep.subr.mxu0 0.0
    %779 = vmatpush2.msra.mxu0 0.0
    %780 = vmatprep.subr.mxu0 0.0
    %781 = vmatpush2.msra.mxu0 0.0
    %782 = vmatprep.subr.mxu0 0.0
    %783 = vmatpush2.msra.mxu0 0.0
    %784 = vmatprep.subr.mxu0 0.0
    %785 = vmatpush2.msra.mxu0 0.0
    %786 = vmatprep.subr.mxu0 0.0
    %787 = vmatpush2.msra.mxu0 0.0
    %788 = vmatprep.subr.mxu0 0.0
    %789 = vmatpush2.msra.mxu0 0.0
    %790 = vmatprep.subr.mxu0 0.0
    %791 = vmatpush2.msra.mxu0 0.0
    %792 = vmatprep.subr.mxu0 0.0
    %793 = vmatpush2.msra.mxu0 0.0
    %794 = vmatprep.subr.mxu0 0.0
    %795 = vmatpush2.msra.mxu0 0.0
    %796 = vmatprep.subr.mxu0 0.0
    %797 = vmatpush2.msra.mxu0 0.0
    %798 = vmatprep.subr.mxu0 0.0
    %799 = vmatpush2.msra.mxu0 0.0
    %800 = vmatprep.subr.mxu0 0.0
    %801 = vmatpush2.msra.mxu0 0.0
    %802 = vmatprep.subr.mxu0 0.0
    %803 = vmatpush2.msra.mxu0 0.0
    %804 = vmatprep.subr.mxu0 0.0
    %805 = vmatpush2.msra.mxu0 0.0
    %806 = vmatprep.mubr.f32.mxu0 0.0
    %807 = vmatmul.mubr.f32.gmra.mxu0 %v655
    %v808 = vpop.f32.mrf.mxu0
    %v809 = vadd.f32 %v740, %v808
    %v810 = vpop.f32.mrf.mxu0
    %811 = vmatprep.mubr.f32.mxu0 0.0
    %812 = vmatmul.mubr.f32.gmra.mxu0 %v656
    %v813 = vpop.f32.mrf.mxu0
    %v814 = vadd.f32 %v740, %v813
    %v815 = vpop.f32.mrf.mxu0
    %816 = vmatprep.mubr.f32.mxu0 0.0
    %817 = vmatmul.mubr.f32.gmra.mxu0 %v657
    %v818 = vpop.f32.mrf.mxu0
    %v819 = vadd.f32 %v740, %v818
    %v820 = vpop.f32.mrf.mxu0
    %821 = vmatprep.mubr.f32.mxu0 0.0
    %822 = vmatmul.mubr.f32.gmra.mxu0 %v658
    %v823 = vpop.f32.mrf.mxu0
    %v824 = vadd.f32 %v740, %v823
    %v825 = vpop.f32.mrf.mxu0
    %826 = vmatprep.mubr.f32.mxu0 0.0
    %827 = vmatmul.mubr.f32.gmra.mxu0 %v659
    %v828 = vpop.f32.mrf.mxu0
    %v829 = vadd.f32 %v740, %v828
    %v830 = vpop.f32.mrf.mxu0
    %831 = vmatprep.mubr.f32.mxu0 0.0
    %832 = vmatmul.mubr.f32.gmra.mxu0 %v660
    %v833 = vpop.f32.mrf.mxu0
    %v834 = vadd.f32 %v740, %v833
    %v835 = vpop.f32.mrf.mxu0
    %836 = vmatprep.mubr.f32.mxu0 0.0
    %837 = vmatmul.mubr.f32.gmra.mxu0 %v661
    %v838 = vpop.f32.mrf.mxu0
    %v839 = vadd.f32 %v740, %v838
    %v840 = vpop.f32.mrf.mxu0
    %841 = vmatprep.mubr.f32.mxu0 0.0
    %842 = vmatmul.mubr.f32.gmra.mxu0 %v662
    %v843 = vpop.f32.mrf.mxu0
    %v844 = vadd.f32 %v740, %v843
    %v845 = vpop.f32.mrf.mxu0
    %846 = vmatprep.mubr.f32.mxu0 0.0
    %847 = vmatmul.mubr.f32.gmra.mxu0 %v663
    %v848 = vpop.f32.mrf.mxu0
    %v849 = vadd.f32 %v740, %v848
    %v850 = vpop.f32.mrf.mxu0
    %851 = vmatprep.mubr.f32.mxu0 0.0
    %852 = vmatmul.mubr.f32.gmra.mxu0 %v664
    %v853 = vpop.f32.mrf.mxu0
    %v854 = vadd.f32 %v740, %v853
    %v855 = vpop.f32.mrf.mxu0
    %856 = vmatprep.mubr.f32.mxu0 0.0
    %857 = vmatmul.mubr.f32.gmra.mxu0 %v665
    %v858 = vpop.f32.mrf.mxu0
    %v859 = vadd.f32 %v740, %v858
    %v860 = vpop.f32.mrf.mxu0
    %861 = vmatprep.mubr.f32.mxu0 0.0
    %862 = vmatmul.mubr.f32.gmra.mxu0 %v666
    %v863 = vpop.f32.mrf.mxu0
    %v864 = vadd.f32 %v740, %v863
    %v865 = vpop.f32.mrf.mxu0
    %866 = vmatprep.mubr.f32.mxu0 0.0
    %867 = vmatmul.mubr.f32.gmra.mxu0 %v667
    %v868 = vpop.f32.mrf.mxu0
    %v869 = vadd.f32 %v740, %v868
    %v870 = vpop.f32.mrf.mxu0
    %871 = vmatprep.mubr.f32.mxu0 0.0
    %872 = vmatmul.mubr.f32.gmra.mxu0 %v668
    %v873 = vpop.f32.mrf.mxu0
    %v874 = vadd.f32 %v740, %v873
    %v875 = vpop.f32.mrf.mxu0
    %876 = vmatprep.mubr.f32.mxu0 0.0
    %877 = vmatmul.mubr.f32.gmra.mxu0 %v669
    %v878 = vpop.f32.mrf.mxu0
    %v879 = vadd.f32 %v740, %v878
    %v880 = vpop.f32.mrf.mxu0
    %881 = vmatprep.mubr.f32.mxu0 0.0
    %882 = vmatmul.mubr.f32.gmra.mxu0 %v670
    %v883 = vpop.f32.mrf.mxu0
    %v884 = vadd.f32 %v740, %v883
    %v885 = vpop.f32.mrf.mxu0
    %886 = vmatprep.mubr.f32.mxu0 0.0
    %887 = vmatmul.mubr.f32.gmra.mxu0 %v671
    %v888 = vpop.f32.mrf.mxu0
    %v889 = vadd.f32 %v740, %v888
    %v890 = vpop.f32.mrf.mxu0
    %891 = vmatprep.mubr.f32.mxu0 0.0
    %892 = vmatmul.mubr.f32.gmra.mxu0 %v672
    %v893 = vpop.f32.mrf.mxu0
    %v894 = vadd.f32 %v740, %v893
    %v895 = vpop.f32.mrf.mxu0
    %896 = vmatprep.mubr.f32.mxu0 0.0
    %897 = vmatmul.mubr.f32.gmra.mxu0 %v673
    %v898 = vpop.f32.mrf.mxu0
    %v899 = vadd.f32 %v740, %v898
    %v900 = vpop.f32.mrf.mxu0
    %901 = vmatprep.mubr.f32.mxu0 0.0
    %902 = vmatmul.mubr.f32.gmra.mxu0 %v674
    %v903 = vpop.f32.mrf.mxu0
    %v904 = vadd.f32 %v740, %v903
    %v905 = vpop.f32.mrf.mxu0
    %906 = vmatprep.mubr.f32.mxu0 0.0
    %907 = vmatmul.mubr.f32.gmra.mxu0 %v675
    %v908 = vpop.f32.mrf.mxu0
    %v909 = vadd.f32 %v740, %v908
    %v910 = vpop.f32.mrf.mxu0
    %911 = vmatprep.mubr.f32.mxu0 0.0
    %912 = vmatmul.mubr.f32.gmra.mxu0 %v676
    %v913 = vpop.f32.mrf.mxu0
    %v914 = vadd.f32 %v740, %v913
    %v915 = vpop.f32.mrf.mxu0
    %916 = vmatprep.mubr.f32.mxu0 0.0
    %917 = vmatmul.mubr.f32.gmra.mxu0 %v677
    %v918 = vpop.f32.mrf.mxu0
    %v919 = vadd.f32 %v740, %v918
    %v920 = vpop.f32.mrf.mxu0
    %921 = vmatprep.mubr.f32.mxu0 0.0
    %922 = vmatmul.mubr.f32.gmra.mxu0 %v678
    %v923 = vpop.f32.mrf.mxu0
    %v924 = vadd.f32 %v740, %v923
    %v925 = vpop.f32.mrf.mxu0
    %926 = vmatprep.mubr.f32.mxu0 0.0
    %927 = vmatmul.mubr.f32.gmra.mxu0 %v679
    %v928 = vpop.f32.mrf.mxu0
    %v929 = vadd.f32 %v740, %v928
    %v930 = vpop.f32.mrf.mxu0
    %931 = vmatprep.mubr.f32.mxu0 0.0
    %932 = vmatmul.mubr.f32.gmra.mxu0 %v680
    %v933 = vpop.f32.mrf.mxu0
    %v934 = vadd.f32 %v740, %v933
    %v935 = vpop.f32.mrf.mxu0
    %936 = vmatprep.mubr.f32.mxu0 0.0
    %937 = vmatmul.mubr.f32.gmra.mxu0 %v681
    %v938 = vpop.f32.mrf.mxu0
    %v939 = vadd.f32 %v740, %v938
    %v940 = vpop.f32.mrf.mxu0
    %941 = vmatprep.mubr.f32.mxu0 0.0
    %942 = vmatmul.mubr.f32.gmra.mxu0 %v682
    %v943 = vpop.f32.mrf.mxu0
    %v944 = vadd.f32 %v740, %v943
    %v945 = vpop.f32.mrf.mxu0
    %946 = vmatprep.mubr.f32.mxu0 0.0
    %947 = vmatmul.mubr.f32.gmra.mxu0 %v683
    %v948 = vpop.f32.mrf.mxu0
    %v949 = vadd.f32 %v740, %v948
    %v950 = vpop.f32.mrf.mxu0
    %951 = vmatprep.mubr.f32.mxu0 0.0
    %952 = vmatmul.mubr.f32.gmra.mxu0 %v684
    %v953 = vpop.f32.mrf.mxu0
    %v954 = vadd.f32 %v740, %v953
    %v955 = vpop.f32.mrf.mxu0
    %956 = vmatprep.mubr.f32.mxu0 0.0
    %957 = vmatmul.mubr.f32.gmra.mxu0 %v685
    %v958 = vpop.f32.mrf.mxu0
    %v959 = vadd.f32 %v740, %v958
    %v960 = vpop.f32.mrf.mxu0
    %961 = vmatprep.mubr.f32.mxu0 0.0
    %962 = vmatmul.mubr.f32.gmra.mxu0 %v686
    %v963 = vpop.f32.mrf.mxu0
    %v964 = vadd.f32 %v740, %v963
    %v965 = vpop.f32.mrf.mxu0
    %966 = vmatprep.mubr.f32.mxu0 0.0
    %967 = vmatmul.mubr.f32.gmra.mxu0 %v687
    %v968 = vpop.f32.mrf.mxu0
    %v969 = vadd.f32 %v740, %v968
    %v970 = vpop.f32.mrf.mxu0
    %971 = vmatprep.mubr.f32.mxu0 0.0
    %972 = vmatmul.mubr.f32.gmra.mxu0 %v688
    %v973 = vpop.f32.mrf.mxu0
    %v974 = vadd.f32 %v740, %v973
    %v975 = vpop.f32.mrf.mxu0
    %976 = vmatprep.mubr.f32.mxu0 0.0
    %977 = vmatmul.mubr.f32.gmra.mxu0 %v689
    %v978 = vpop.f32.mrf.mxu0
    %v979 = vadd.f32 %v740, %v978
    %v980 = vpop.f32.mrf.mxu0
    %981 = vmatprep.mubr.f32.mxu0 0.0
    %982 = vmatmul.mubr.f32.gmra.mxu0 %v690
    %v983 = vpop.f32.mrf.mxu0
    %v984 = vadd.f32 %v740, %v983
    %v985 = vpop.f32.mrf.mxu0
    %986 = vmatprep.mubr.f32.mxu0 0.0
    %987 = vmatmul.mubr.f32.gmra.mxu0 %v691
    %v988 = vpop.f32.mrf.mxu0
    %v989 = vadd.f32 %v740, %v988
    %v990 = vpop.f32.mrf.mxu0
    %991 = vmatprep.mubr.f32.mxu0 0.0
    %992 = vmatmul.mubr.f32.gmra.mxu0 %v692
    %v993 = vpop.f32.mrf.mxu0
    %v994 = vadd.f32 %v740, %v993
    %v995 = vpop.f32.mrf.mxu0
    %996 = vmatprep.mubr.f32.mxu0 0.0
    %997 = vmatmul.mubr.f32.gmra.mxu0 %v693
    %v998 = vpop.f32.mrf.mxu0
    %v999 = vadd.f32 %v740, %v998
    %v1000 = vpop.f32.mrf.mxu0
    %1001 = vmatprep.mubr.f32.mxu0 0.0
    %1002 = vmatmul.mubr.f32.gmra.mxu0 %v694
    %v1003 = vpop.f32.mrf.mxu0
    %v1004 = vadd.f32 %v740, %v1003
    %v1005 = vpop.f32.mrf.mxu0
    %1006 = vmatprep.mubr.f32.mxu0 0.0
    %1007 = vmatmul.mubr.f32.gmra.mxu0 %v695
    %v1008 = vpop.f32.mrf.mxu0
    %v1009 = vadd.f32 %v740, %v1008
    %v1010 = vpop.f32.mrf.mxu0
    %1011 = vmatprep.mubr.f32.mxu0 0.0
    %1012 = vmatmul.mubr.f32.gmra.mxu0 %v696
    %v1013 = vpop.f32.mrf.mxu0
    %v1014 = vadd.f32 %v740, %v1013
    %v1015 = vpop.f32.mrf.mxu0
    %1016 = vmatprep.mubr.f32.mxu0 0.0
    %1017 = vmatmul.mubr.f32.gmra.mxu0 %v697
    %v1018 = vpop.f32.mrf.mxu0
    %v1019 = vadd.f32 %v740, %v1018
    %v1020 = vpop.f32.mrf.mxu0
    %1021 = vmatprep.mubr.f32.mxu0 0.0
    %1022 = vmatmul.mubr.f32.gmra.mxu0 %v698
    %v1023 = vpop.f32.mrf.mxu0
    %v1024 = vadd.f32 %v740, %v1023
    %v1025 = vpop.f32.mrf.mxu0
    %1026 = vmatprep.mubr.f32.mxu0 0.0
    %1027 = vmatmul.mubr.f32.gmra.mxu0 %v699
    %v1028 = vpop.f32.mrf.mxu0
    %v1029 = vadd.f32 %v740, %v1028
    %v1030 = vpop.f32.mrf.mxu0
    %1031 = vmatprep.mubr.f32.mxu0 0.0
    %1032 = vmatmul.mubr.f32.gmra.mxu0 %v700
    %v1033 = vpop.f32.mrf.mxu0
    %v1034 = vadd.f32 %v740, %v1033
    %v1035 = vpop.f32.mrf.mxu0
    %1036 = vmatprep.mubr.f32.mxu0 0.0
    %1037 = vmatmul.mubr.f32.gmra.mxu0 %v701
    %v1038 = vpop.f32.mrf.mxu0
    %v1039 = vadd.f32 %v740, %v1038
    %v1040 = vpop.f32.mrf.mxu0
    %1041 = vmatprep.mubr.f32.mxu0 0.0
    %1042 = vmatmul.mubr.f32.gmra.mxu0 %v702
    %v1043 = vpop.f32.mrf.mxu0
    %v1044 = vadd.f32 %v740, %v1043
    %v1045 = vpop.f32.mrf.mxu0
    %1046 = vmatprep.mubr.f32.mxu0 0.0
    %1047 = vmatmul.mubr.f32.gmra.mxu0 %v703
    %v1048 = vpop.f32.mrf.mxu0
    %v1049 = vadd.f32 %v740, %v1048
    %v1050 = vpop.f32.mrf.mxu0
    %1051 = vmatprep.mubr.f32.mxu0 0.0
    %1052 = vmatmul.mubr.f32.gmra.mxu0 %v704
    %v1053 = vpop.f32.mrf.mxu0
    %v1054 = vadd.f32 %v740, %v1053
    %v1055 = vpop.f32.mrf.mxu0
    %1056 = vmatprep.mubr.f32.mxu0 0.0
    %1057 = vmatmul.mubr.f32.gmra.mxu0 %v705
    %v1058 = vpop.f32.mrf.mxu0
    %v1059 = vadd.f32 %v740, %v1058
    %v1060 = vpop.f32.mrf.mxu0
    %1061 = vmatprep.mubr.f32.mxu0 0.0
    %1062 = vmatmul.mubr.f32.gmra.mxu0 %v706
    %v1063 = vpop.f32.mrf.mxu0
    %v1064 = vadd.f32 %v740, %v1063
    %v1065 = vpop.f32.mrf.mxu0
    %1066 = vmatprep.mubr.f32.mxu0 0.0
    %1067 = vmatmul.mubr.f32.gmra.mxu0 %v707
    %v1068 = vpop.f32.mrf.mxu0
    %v1069 = vadd.f32 %v740, %v1068
    %v1070 = vpop.f32.mrf.mxu0
    %1071 = vmatprep.mubr.f32.mxu0 0.0
    %1072 = vmatmul.mubr.f32.gmra.mxu0 %v708
    %v1073 = vpop.f32.mrf.mxu0
    %v1074 = vadd.f32 %v740, %v1073
    %v1075 = vpop.f32.mrf.mxu0
    %1076 = vmatprep.mubr.f32.mxu0 0.0
    %1077 = vmatmul.mubr.f32.gmra.mxu0 %v709
    %v1078 = vpop.f32.mrf.mxu0
    %v1079 = vadd.f32 %v740, %v1078
    %v1080 = vpop.f32.mrf.mxu0
    %1081 = vmatprep.mubr.f32.mxu0 0.0
    %1082 = vmatmul.mubr.f32.gmra.mxu0 %v710
    %v1083 = vpop.f32.mrf.mxu0
    %v1084 = vadd.f32 %v740, %v1083
    %v1085 = vpop.f32.mrf.mxu0
    %1086 = vmatprep.mubr.f32.mxu0 0.0
    %1087 = vmatmul.mubr.f32.gmra.mxu0 %v711
    %v1088 = vpop.f32.mrf.mxu0
    %v1089 = vadd.f32 %v740, %v1088
    %v1090 = vpop.f32.mrf.mxu0
    %1091 = vmatprep.mubr.f32.mxu0 0.0
    %1092 = vmatmul.mubr.f32.gmra.mxu0 %v712
    %v1093 = vpop.f32.mrf.mxu0
    %v1094 = vadd.f32 %v740, %v1093
    %v1095 = vpop.f32.mrf.mxu0
    %1096 = vmatprep.mubr.f32.mxu0 0.0
    %1097 = vmatmul.mubr.f32.gmra.mxu0 %v713
    %v1098 = vpop.f32.mrf.mxu0
    %v1099 = vadd.f32 %v740, %v1098
    %v1100 = vpop.f32.mrf.mxu0
    %1101 = vmatprep.mubr.f32.mxu0 0.0
    %1102 = vmatmul.mubr.f32.gmra.mxu0 %v714
    %v1103 = vpop.f32.mrf.mxu0
    %v1104 = vadd.f32 %v740, %v1103
    %v1105 = vpop.f32.mrf.mxu0
    %1106 = vmatprep.mubr.f32.mxu0 0.0
    %1107 = vmatmul.mubr.f32.gmra.mxu0 %v715
    %v1108 = vpop.f32.mrf.mxu0
    %v1109 = vadd.f32 %v740, %v1108
    %v1110 = vpop.f32.mrf.mxu0
    %1111 = vmatprep.mubr.f32.mxu0 0.0
    %1112 = vmatmul.mubr.f32.gmra.mxu0 %v716
    %v1113 = vpop.f32.mrf.mxu0
    %v1114 = vadd.f32 %v740, %v1113
    %v1115 = vpop.f32.mrf.mxu0
    %1116 = vmatprep.mubr.f32.mxu0 0.0
    %1117 = vmatmul.mubr.f32.gmra.mxu0 %v717
    %v1118 = vpop.f32.mrf.mxu0
    %v1119 = vadd.f32 %v740, %v1118
    %v1120 = vpop.f32.mrf.mxu0
    %1121 = vmatprep.mubr.f32.mxu0 0.0
    %1122 = vmatmul.mubr.f32.gmra.mxu0 %v718
    %v1123 = vpop.f32.mrf.mxu0
    %v1124 = vadd.f32 %v740, %v1123
    %v1125 = vpop.f32.mrf.mxu0
    %1126 = vdwg.mxu0
    %1127 = vst [vmem:[#allocation14] sm:$0xff] %v809
    %1128 = vst [vmem:[#allocation14 + $0x8] sm:$0xff] %v814
    %1129 = vst [vmem:[#allocation14 + $0x10] sm:$0xff] %v819
    %1130 = vst [vmem:[#allocation14 + $0x18] sm:$0xff] %v824
    %1131 = vst [vmem:[#allocation14 + $0x20] sm:$0xff] %v829
    %1132 = vst [vmem:[#allocation14 + $0x28] sm:$0xff] %v834
    %1133 = vst [vmem:[#allocation14 + $0x30] sm:$0xff] %v839
    %1134 = vst [vmem:[#allocation14 + $0x38] sm:$0xff] %v844
    %1135 = vst [vmem:[#allocation14 + $0x40] sm:$0xff] %v849
    %1136 = vst [vmem:[#allocation14 + $0x48] sm:$0xff] %v854
    %1137 = vst [vmem:[#allocation14 + $0x50] sm:$0xff] %v859
    %1138 = vst [vmem:[#allocation14 + $0x58] sm:$0xff] %v864
    %1139 = vst [vmem:[#allocation14 + $0x60] sm:$0xff] %v869
    %1140 = vst [vmem:[#allocation14 + $0x68] sm:$0xff] %v874
    %1141 = vst [vmem:[#allocation14 + $0x70] sm:$0xff] %v879
    %1142 = vst [vmem:[#allocation14 + $0x78] sm:$0xff] %v884
    %1143 = vst [vmem:[#allocation14 + $0x80] sm:$0xff] %v889
    %1144 = vst [vmem:[#allocation14 + $0x88] sm:$0xff] %v894
    %1145 = vst [vmem:[#allocation14 + $0x90] sm:$0xff] %v899
    %1146 = vst [vmem:[#allocation14 + $0x98] sm:$0xff] %v904
    %1147 = vst [vmem:[#allocation14 + $0xa0] sm:$0xff] %v909
    %1148 = vst [vmem:[#allocation14 + $0xa8] sm:$0xff] %v914
    %1149 = vst [vmem:[#allocation14 + $0xb0] sm:$0xff] %v919
    %1150 = vst [vmem:[#allocation14 + $0xb8] sm:$0xff] %v924
    %1151 = vst [vmem:[#allocation14 + $0xc0] sm:$0xff] %v929
    %1152 = vst [vmem:[#allocation14 + $0xc8] sm:$0xff] %v934
    %1153 = vst [vmem:[#allocation14 + $0xd0] sm:$0xff] %v939
    %1154 = vst [vmem:[#allocation14 + $0xd8] sm:$0xff] %v944
    %1155 = vst [vmem:[#allocation14 + $0xe0] sm:$0xff] %v949
    %1156 = vst [vmem:[#allocation14 + $0xe8] sm:$0xff] %v954
    %1157 = vst [vmem:[#allocation14 + $0xf0] sm:$0xff] %v959
    %1158 = vst [vmem:[#allocation14 + $0xf8] sm:$0xff] %v964
    %1159 = vst [vmem:[#allocation14 + $0x100] sm:$0xff] %v969
    %1160 = vst [vmem:[#allocation14 + $0x108] sm:$0xff] %v974
    %1161 = vst [vmem:[#allocation14 + $0x110] sm:$0xff] %v979
    %1162 = vst [vmem:[#allocation14 + $0x118] sm:$0xff] %v984
    %1163 = vst [vmem:[#allocation14 + $0x120] sm:$0xff] %v989
    %1164 = vst [vmem:[#allocation14 + $0x128] sm:$0xff] %v994
    %1165 = vst [vmem:[#allocation14 + $0x130] sm:$0xff] %v999
    %1166 = vst [vmem:[#allocation14 + $0x138] sm:$0xff] %v1004
    %1167 = vst [vmem:[#allocation14 + $0x140] sm:$0xff] %v1009
    %1168 = vst [vmem:[#allocation14 + $0x148] sm:$0xff] %v1014
    %1169 = vst [vmem:[#allocation14 + $0x150] sm:$0xff] %v1019
    %1170 = vst [vmem:[#allocation14 + $0x158] sm:$0xff] %v1024
    %1171 = vst [vmem:[#allocation14 + $0x160] sm:$0xff] %v1029
    %1172 = vst [vmem:[#allocation14 + $0x168] sm:$0xff] %v1034
    %1173 = vst [vmem:[#allocation14 + $0x170] sm:$0xff] %v1039
    %1174 = vst [vmem:[#allocation14 + $0x178] sm:$0xff] %v1044
    %1175 = vst [vmem:[#allocation14 + $0x180] sm:$0xff] %v1049
    %1176 = vst [vmem:[#allocation14 + $0x188] sm:$0xff] %v1054
    %1177 = vst [vmem:[#allocation14 + $0x190] sm:$0xff] %v1059
    %1178 = vst [vmem:[#allocation14 + $0x198] sm:$0xff] %v1064
    %1179 = vst [vmem:[#allocation14 + $0x1a0] sm:$0xff] %v1069
    %1180 = vst [vmem:[#allocation14 + $0x1a8] sm:$0xff] %v1074
    %1181 = vst [vmem:[#allocation14 + $0x1b0] sm:$0xff] %v1079
    %1182 = vst [vmem:[#allocation14 + $0x1b8] sm:$0xff] %v1084
    %1183 = vst [vmem:[#allocation14 + $0x1c0] sm:$0xff] %v1089
    %1184 = vst [vmem:[#allocation14 + $0x1c8] sm:$0xff] %v1094
    %1185 = vst [vmem:[#allocation14 + $0x1d0] sm:$0xff] %v1099
    %1186 = vst [vmem:[#allocation14 + $0x1d8] sm:$0xff] %v1104
    %1187 = vst [vmem:[#allocation14 + $0x1e0] sm:$0xff] %v1109
    %1188 = vst [vmem:[#allocation14 + $0x1e8] sm:$0xff] %v1114
    %1189 = vst [vmem:[#allocation14 + $0x1f0] sm:$0xff] %v1119
    %1190 = vst [vmem:[#allocation14 + $0x1f8] sm:$0xff] %v1124
    %v1191 = vld [vmem:[#allocation7] sm:$0xff]
    %v1192 = vld [vmem:[#allocation7 + $0x8] sm:$0xff]
    %v1193 = vld [vmem:[#allocation7 + $0x10] sm:$0xff]
    %v1194 = vld [vmem:[#allocation7 + $0x18] sm:$0xff]
    %v1195 = vld [vmem:[#allocation7 + $0x20] sm:$0xff]
    %v1196 = vld [vmem:[#allocation7 + $0x28] sm:$0xff]
    %v1197 = vld [vmem:[#allocation7 + $0x30] sm:$0xff]
    %v1198 = vld [vmem:[#allocation7 + $0x38] sm:$0xff]
    %v1199 = vld [vmem:[#allocation7 + $0x40] sm:$0xff]
    %v1200 = vld [vmem:[#allocation7 + $0x48] sm:$0xff]
    %v1201 = vld [vmem:[#allocation7 + $0x50] sm:$0xff]
    %v1202 = vld [vmem:[#allocation7 + $0x58] sm:$0xff]
    %v1203 = vld [vmem:[#allocation7 + $0x60] sm:$0xff]
    %v1204 = vld [vmem:[#allocation7 + $0x68] sm:$0xff]
    %v1205 = vld [vmem:[#allocation7 + $0x70] sm:$0xff]
    %v1206 = vld [vmem:[#allocation7 + $0x78] sm:$0xff]
    %v1207 = vld [vmem:[#allocation7 + $0x80] sm:$0xff]
    %v1208 = vld [vmem:[#allocation7 + $0x88] sm:$0xff]
    %v1209 = vld [vmem:[#allocation7 + $0x90] sm:$0xff]
    %v1210 = vld [vmem:[#allocation7 + $0x98] sm:$0xff]
    %v1211 = vld [vmem:[#allocation7 + $0xa0] sm:$0xff]
    %v1212 = vld [vmem:[#allocation7 + $0xa8] sm:$0xff]
    %v1213 = vld [vmem:[#allocation7 + $0xb0] sm:$0xff]
    %v1214 = vld [vmem:[#allocation7 + $0xb8] sm:$0xff]
    %v1215 = vld [vmem:[#allocation7 + $0xc0] sm:$0xff]
    %v1216 = vld [vmem:[#allocation7 + $0xc8] sm:$0xff]
    %v1217 = vld [vmem:[#allocation7 + $0xd0] sm:$0xff]
    %v1218 = vld [vmem:[#allocation7 + $0xd8] sm:$0xff]
    %v1219 = vld [vmem:[#allocation7 + $0xe0] sm:$0xff]
    %v1220 = vld [vmem:[#allocation7 + $0xe8] sm:$0xff]
    %v1221 = vld [vmem:[#allocation7 + $0xf0] sm:$0xff]
    %v1222 = vld [vmem:[#allocation7 + $0xf8] sm:$0xff]
    %v1223 = vld [vmem:[#allocation7 + $0x100] sm:$0xff]
    %v1224 = vld [vmem:[#allocation7 + $0x108] sm:$0xff]
    %v1225 = vld [vmem:[#allocation7 + $0x110] sm:$0xff]
    %v1226 = vld [vmem:[#allocation7 + $0x118] sm:$0xff]
    %v1227 = vld [vmem:[#allocation7 + $0x120] sm:$0xff]
    %v1228 = vld [vmem:[#allocation7 + $0x128] sm:$0xff]
    %v1229 = vld [vmem:[#allocation7 + $0x130] sm:$0xff]
    %v1230 = vld [vmem:[#allocation7 + $0x138] sm:$0xff]
    %v1231 = vld [vmem:[#allocation7 + $0x140] sm:$0xff]
    %v1232 = vld [vmem:[#allocation7 + $0x148] sm:$0xff]
    %v1233 = vld [vmem:[#allocation7 + $0x150] sm:$0xff]
    %v1234 = vld [vmem:[#allocation7 + $0x158] sm:$0xff]
    %v1235 = vld [vmem:[#allocation7 + $0x160] sm:$0xff]
    %v1236 = vld [vmem:[#allocation7 + $0x168] sm:$0xff]
    %v1237 = vld [vmem:[#allocation7 + $0x170] sm:$0xff]
    %v1238 = vld [vmem:[#allocation7 + $0x178] sm:$0xff]
    %v1239 = vld [vmem:[#allocation7 + $0x180] sm:$0xff]
    %v1240 = vld [vmem:[#allocation7 + $0x188] sm:$0xff]
    %v1241 = vld [vmem:[#allocation7 + $0x190] sm:$0xff]
    %v1242 = vld [vmem:[#allocation7 + $0x198] sm:$0xff]
    %v1243 = vld [vmem:[#allocation7 + $0x1a0] sm:$0xff]
    %v1244 = vld [vmem:[#allocation7 + $0x1a8] sm:$0xff]
    %v1245 = vld [vmem:[#allocation7 + $0x1b0] sm:$0xff]
    %v1246 = vld [vmem:[#allocation7 + $0x1b8] sm:$0xff]
    %v1247 = vld [vmem:[#allocation7 + $0x1c0] sm:$0xff]
    %v1248 = vld [vmem:[#allocation7 + $0x1c8] sm:$0xff]
    %v1249 = vld [vmem:[#allocation7 + $0x1d0] sm:$0xff]
    %v1250 = vld [vmem:[#allocation7 + $0x1d8] sm:$0xff]
    %v1251 = vld [vmem:[#allocation7 + $0x1e0] sm:$0xff]
    %v1252 = vld [vmem:[#allocation7 + $0x1e8] sm:$0xff]
    %v1253 = vld [vmem:[#allocation7 + $0x1f0] sm:$0xff]
    %v1254 = vld [vmem:[#allocation7 + $0x1f8] sm:$0xff]
    %v1255 = vld [vmem:[#allocation11] sm:$0xff]
    %v1256 = vld [vmem:[#allocation11 + $0x8] sm:$0xff]
    %v1257 = vld [vmem:[#allocation11 + $0x10] sm:$0xff]
    %v1258 = vld [vmem:[#allocation11 + $0x18] sm:$0xff]
    %v1259 = vld [vmem:[#allocation11 + $0x20] sm:$0xff]
    %v1260 = vld [vmem:[#allocation11 + $0x28] sm:$0xff]
    %v1261 = vld [vmem:[#allocation11 + $0x30] sm:$0xff]
    %v1262 = vld [vmem:[#allocation11 + $0x38] sm:$0xff]
    %v1263 = vld [vmem:[#allocation11 + $0x40] sm:$0xff]
    %v1264 = vld [vmem:[#allocation11 + $0x48] sm:$0xff]
    %v1265 = vld [vmem:[#allocation11 + $0x50] sm:$0xff]
    %v1266 = vld [vmem:[#allocation11 + $0x58] sm:$0xff]
    %v1267 = vld [vmem:[#allocation11 + $0x60] sm:$0xff]
    %v1268 = vld [vmem:[#allocation11 + $0x68] sm:$0xff]
    %v1269 = vld [vmem:[#allocation11 + $0x70] sm:$0xff]
    %v1270 = vld [vmem:[#allocation11 + $0x78] sm:$0xff]
    %v1271 = vld [vmem:[%s8] sm:$0x1]
    %v1273 = vlaneseq
    %v1274 = vshrl.u32 %v1273, 7
    %v1275 = vsub.s32 0, %v1274
    %v1276 = vrot.slane %v1271, %v1275
    %1278 = vmatprep.subr.mxu0 0.0
    %1279 = vmatpush1.msra.mxu0 %v1270
    %1280 = vmatprep.subr.mxu0 0.0
    %1281 = vmatpush1.msra.mxu0 %v1269
    %1282 = vmatprep.subr.mxu0 0.0
    %1283 = vmatpush1.msra.mxu0 %v1268
    %1284 = vmatprep.subr.mxu0 0.0
    %1285 = vmatpush1.msra.mxu0 %v1267
    %1286 = vmatprep.subr.mxu0 0.0
    %1287 = vmatpush1.msra.mxu0 %v1266
    %1288 = vmatprep.subr.mxu0 0.0
    %1289 = vmatpush1.msra.mxu0 %v1265
    %1290 = vmatprep.subr.mxu0 0.0
    %1291 = vmatpush1.msra.mxu0 %v1264
    %1292 = vmatprep.subr.mxu0 0.0
    %1293 = vmatpush1.msra.mxu0 %v1263
    %1294 = vmatprep.subr.mxu0 0.0
    %1295 = vmatpush1.msra.mxu0 %v1262
    %1296 = vmatprep.subr.mxu0 0.0
    %1297 = vmatpush1.msra.mxu0 %v1261
    %1298 = vmatprep.subr.mxu0 0.0
    %1299 = vmatpush1.msra.mxu0 %v1260
    %1300 = vmatprep.subr.mxu0 0.0
    %1301 = vmatpush1.msra.mxu0 %v1259
    %1302 = vmatprep.subr.mxu0 0.0
    %1303 = vmatpush1.msra.mxu0 %v1258
    %1304 = vmatprep.subr.mxu0 0.0
    %1305 = vmatpush1.msra.mxu0 %v1257
    %1306 = vmatprep.subr.mxu0 0.0
    %1307 = vmatpush1.msra.mxu0 %v1256
    %1308 = vmatprep.subr.mxu0 0.0
    %1309 = vmatpush1.msra.mxu0 %v1255
    %1310 = vmatprep.subr.mxu0 0.0
    %1311 = vmatpush2.msra.mxu0 0.0
    %1312 = vmatprep.subr.mxu0 0.0
    %1313 = vmatpush2.msra.mxu0 0.0
    %1314 = vmatprep.subr.mxu0 0.0
    %1315 = vmatpush2.msra.mxu0 0.0
    %1316 = vmatprep.subr.mxu0 0.0
    %1317 = vmatpush2.msra.mxu0 0.0
    %1318 = vmatprep.subr.mxu0 0.0
    %1319 = vmatpush2.msra.mxu0 0.0
    %1320 = vmatprep.subr.mxu0 0.0
    %1321 = vmatpush2.msra.mxu0 0.0
    %1322 = vmatprep.subr.mxu0 0.0
    %1323 = vmatpush2.msra.mxu0 0.0
    %1324 = vmatprep.subr.mxu0 0.0
    %1325 = vmatpush2.msra.mxu0 0.0
    %1326 = vmatprep.subr.mxu0 0.0
    %1327 = vmatpush2.msra.mxu0 0.0
    %1328 = vmatprep.subr.mxu0 0.0
    %1329 = vmatpush2.msra.mxu0 0.0
    %1330 = vmatprep.subr.mxu0 0.0
    %1331 = vmatpush2.msra.mxu0 0.0
    %1332 = vmatprep.subr.mxu0 0.0
    %1333 = vmatpush2.msra.mxu0 0.0
    %1334 = vmatprep.subr.mxu0 0.0
    %1335 = vmatpush2.msra.mxu0 0.0
    %1336 = vmatprep.subr.mxu0 0.0
    %1337 = vmatpush2.msra.mxu0 0.0
    %1338 = vmatprep.subr.mxu0 0.0
    %1339 = vmatpush2.msra.mxu0 0.0
    %1340 = vmatprep.subr.mxu0 0.0
    %1341 = vmatpush2.msra.mxu0 0.0
    %1342 = vmatprep.mubr.f32.mxu0 0.0
    %1343 = vmatmul.mubr.f32.gmra.mxu0 %v1191
    %v1344 = vpop.f32.mrf.mxu0
    %v1345 = vadd.f32 %v1276, %v1344
    %v1346 = vpop.f32.mrf.mxu0
    %1347 = vmatprep.mubr.f32.mxu0 0.0
    %1348 = vmatmul.mubr.f32.gmra.mxu0 %v1192
    %v1349 = vpop.f32.mrf.mxu0
    %v1350 = vadd.f32 %v1276, %v1349
    %v1351 = vpop.f32.mrf.mxu0
    %1352 = vmatprep.mubr.f32.mxu0 0.0
    %1353 = vmatmul.mubr.f32.gmra.mxu0 %v1193
    %v1354 = vpop.f32.mrf.mxu0
    %v1355 = vadd.f32 %v1276, %v1354
    %v1356 = vpop.f32.mrf.mxu0
    %1357 = vmatprep.mubr.f32.mxu0 0.0
    %1358 = vmatmul.mubr.f32.gmra.mxu0 %v1194
    %v1359 = vpop.f32.mrf.mxu0
    %v1360 = vadd.f32 %v1276, %v1359
    %v1361 = vpop.f32.mrf.mxu0
    %1362 = vmatprep.mubr.f32.mxu0 0.0
    %1363 = vmatmul.mubr.f32.gmra.mxu0 %v1195
    %v1364 = vpop.f32.mrf.mxu0
    %v1365 = vadd.f32 %v1276, %v1364
    %v1366 = vpop.f32.mrf.mxu0
    %1367 = vmatprep.mubr.f32.mxu0 0.0
    %1368 = vmatmul.mubr.f32.gmra.mxu0 %v1196
    %v1369 = vpop.f32.mrf.mxu0
    %v1370 = vadd.f32 %v1276, %v1369
    %v1371 = vpop.f32.mrf.mxu0
    %1372 = vmatprep.mubr.f32.mxu0 0.0
    %1373 = vmatmul.mubr.f32.gmra.mxu0 %v1197
    %v1374 = vpop.f32.mrf.mxu0
    %v1375 = vadd.f32 %v1276, %v1374
    %v1376 = vpop.f32.mrf.mxu0
    %1377 = vmatprep.mubr.f32.mxu0 0.0
    %1378 = vmatmul.mubr.f32.gmra.mxu0 %v1198
    %v1379 = vpop.f32.mrf.mxu0
    %v1380 = vadd.f32 %v1276, %v1379
    %v1381 = vpop.f32.mrf.mxu0
    %1382 = vmatprep.mubr.f32.mxu0 0.0
    %1383 = vmatmul.mubr.f32.gmra.mxu0 %v1199
    %v1384 = vpop.f32.mrf.mxu0
    %v1385 = vadd.f32 %v1276, %v1384
    %v1386 = vpop.f32.mrf.mxu0
    %1387 = vmatprep.mubr.f32.mxu0 0.0
    %1388 = vmatmul.mubr.f32.gmra.mxu0 %v1200
    %v1389 = vpop.f32.mrf.mxu0
    %v1390 = vadd.f32 %v1276, %v1389
    %v1391 = vpop.f32.mrf.mxu0
    %1392 = vmatprep.mubr.f32.mxu0 0.0
    %1393 = vmatmul.mubr.f32.gmra.mxu0 %v1201
    %v1394 = vpop.f32.mrf.mxu0
    %v1395 = vadd.f32 %v1276, %v1394
    %v1396 = vpop.f32.mrf.mxu0
    %1397 = vmatprep.mubr.f32.mxu0 0.0
    %1398 = vmatmul.mubr.f32.gmra.mxu0 %v1202
    %v1399 = vpop.f32.mrf.mxu0
    %v1400 = vadd.f32 %v1276, %v1399
    %v1401 = vpop.f32.mrf.mxu0
    %1402 = vmatprep.mubr.f32.mxu0 0.0
    %1403 = vmatmul.mubr.f32.gmra.mxu0 %v1203
    %v1404 = vpop.f32.mrf.mxu0
    %v1405 = vadd.f32 %v1276, %v1404
    %v1406 = vpop.f32.mrf.mxu0
    %1407 = vmatprep.mubr.f32.mxu0 0.0
    %1408 = vmatmul.mubr.f32.gmra.mxu0 %v1204
    %v1409 = vpop.f32.mrf.mxu0
    %v1410 = vadd.f32 %v1276, %v1409
    %v1411 = vpop.f32.mrf.mxu0
    %1412 = vmatprep.mubr.f32.mxu0 0.0
    %1413 = vmatmul.mubr.f32.gmra.mxu0 %v1205
    %v1414 = vpop.f32.mrf.mxu0
    %v1415 = vadd.f32 %v1276, %v1414
    %v1416 = vpop.f32.mrf.mxu0
    %1417 = vmatprep.mubr.f32.mxu0 0.0
    %1418 = vmatmul.mubr.f32.gmra.mxu0 %v1206
    %v1419 = vpop.f32.mrf.mxu0
    %v1420 = vadd.f32 %v1276, %v1419
    %v1421 = vpop.f32.mrf.mxu0
    %1422 = vmatprep.mubr.f32.mxu0 0.0
    %1423 = vmatmul.mubr.f32.gmra.mxu0 %v1207
    %v1424 = vpop.f32.mrf.mxu0
    %v1425 = vadd.f32 %v1276, %v1424
    %v1426 = vpop.f32.mrf.mxu0
    %1427 = vmatprep.mubr.f32.mxu0 0.0
    %1428 = vmatmul.mubr.f32.gmra.mxu0 %v1208
    %v1429 = vpop.f32.mrf.mxu0
    %v1430 = vadd.f32 %v1276, %v1429
    %v1431 = vpop.f32.mrf.mxu0
    %1432 = vmatprep.mubr.f32.mxu0 0.0
    %1433 = vmatmul.mubr.f32.gmra.mxu0 %v1209
    %v1434 = vpop.f32.mrf.mxu0
    %v1435 = vadd.f32 %v1276, %v1434
    %v1436 = vpop.f32.mrf.mxu0
    %1437 = vmatprep.mubr.f32.mxu0 0.0
    %1438 = vmatmul.mubr.f32.gmra.mxu0 %v1210
    %v1439 = vpop.f32.mrf.mxu0
    %v1440 = vadd.f32 %v1276, %v1439
    %v1441 = vpop.f32.mrf.mxu0
    %1442 = vmatprep.mubr.f32.mxu0 0.0
    %1443 = vmatmul.mubr.f32.gmra.mxu0 %v1211
    %v1444 = vpop.f32.mrf.mxu0
    %v1445 = vadd.f32 %v1276, %v1444
    %v1446 = vpop.f32.mrf.mxu0
    %1447 = vmatprep.mubr.f32.mxu0 0.0
    %1448 = vmatmul.mubr.f32.gmra.mxu0 %v1212
    %v1449 = vpop.f32.mrf.mxu0
    %v1450 = vadd.f32 %v1276, %v1449
    %v1451 = vpop.f32.mrf.mxu0
    %1452 = vmatprep.mubr.f32.mxu0 0.0
    %1453 = vmatmul.mubr.f32.gmra.mxu0 %v1213
    %v1454 = vpop.f32.mrf.mxu0
    %v1455 = vadd.f32 %v1276, %v1454
    %v1456 = vpop.f32.mrf.mxu0
    %1457 = vmatprep.mubr.f32.mxu0 0.0
    %1458 = vmatmul.mubr.f32.gmra.mxu0 %v1214
    %v1459 = vpop.f32.mrf.mxu0
    %v1460 = vadd.f32 %v1276, %v1459
    %v1461 = vpop.f32.mrf.mxu0
    %1462 = vmatprep.mubr.f32.mxu0 0.0
    %1463 = vmatmul.mubr.f32.gmra.mxu0 %v1215
    %v1464 = vpop.f32.mrf.mxu0
    %v1465 = vadd.f32 %v1276, %v1464
    %v1466 = vpop.f32.mrf.mxu0
    %1467 = vmatprep.mubr.f32.mxu0 0.0
    %1468 = vmatmul.mubr.f32.gmra.mxu0 %v1216
    %v1469 = vpop.f32.mrf.mxu0
    %v1470 = vadd.f32 %v1276, %v1469
    %v1471 = vpop.f32.mrf.mxu0
    %1472 = vmatprep.mubr.f32.mxu0 0.0
    %1473 = vmatmul.mubr.f32.gmra.mxu0 %v1217
    %v1474 = vpop.f32.mrf.mxu0
    %v1475 = vadd.f32 %v1276, %v1474
    %v1476 = vpop.f32.mrf.mxu0
    %1477 = vmatprep.mubr.f32.mxu0 0.0
    %1478 = vmatmul.mubr.f32.gmra.mxu0 %v1218
    %v1479 = vpop.f32.mrf.mxu0
    %v1480 = vadd.f32 %v1276, %v1479
    %v1481 = vpop.f32.mrf.mxu0
    %1482 = vmatprep.mubr.f32.mxu0 0.0
    %1483 = vmatmul.mubr.f32.gmra.mxu0 %v1219
    %v1484 = vpop.f32.mrf.mxu0
    %v1485 = vadd.f32 %v1276, %v1484
    %v1486 = vpop.f32.mrf.mxu0
    %1487 = vmatprep.mubr.f32.mxu0 0.0
    %1488 = vmatmul.mubr.f32.gmra.mxu0 %v1220
    %v1489 = vpop.f32.mrf.mxu0
    %v1490 = vadd.f32 %v1276, %v1489
    %v1491 = vpop.f32.mrf.mxu0
    %1492 = vmatprep.mubr.f32.mxu0 0.0
    %1493 = vmatmul.mubr.f32.gmra.mxu0 %v1221
    %v1494 = vpop.f32.mrf.mxu0
    %v1495 = vadd.f32 %v1276, %v1494
    %v1496 = vpop.f32.mrf.mxu0
    %1497 = vmatprep.mubr.f32.mxu0 0.0
    %1498 = vmatmul.mubr.f32.gmra.mxu0 %v1222
    %v1499 = vpop.f32.mrf.mxu0
    %v1500 = vadd.f32 %v1276, %v1499
    %v1501 = vpop.f32.mrf.mxu0
    %1502 = vmatprep.mubr.f32.mxu0 0.0
    %1503 = vmatmul.mubr.f32.gmra.mxu0 %v1223
    %v1504 = vpop.f32.mrf.mxu0
    %v1505 = vadd.f32 %v1276, %v1504
    %v1506 = vpop.f32.mrf.mxu0
    %1507 = vmatprep.mubr.f32.mxu0 0.0
    %1508 = vmatmul.mubr.f32.gmra.mxu0 %v1224
    %v1509 = vpop.f32.mrf.mxu0
    %v1510 = vadd.f32 %v1276, %v1509
    %v1511 = vpop.f32.mrf.mxu0
    %1512 = vmatprep.mubr.f32.mxu0 0.0
    %1513 = vmatmul.mubr.f32.gmra.mxu0 %v1225
    %v1514 = vpop.f32.mrf.mxu0
    %v1515 = vadd.f32 %v1276, %v1514
    %v1516 = vpop.f32.mrf.mxu0
    %1517 = vmatprep.mubr.f32.mxu0 0.0
    %1518 = vmatmul.mubr.f32.gmra.mxu0 %v1226
    %v1519 = vpop.f32.mrf.mxu0
    %v1520 = vadd.f32 %v1276, %v1519
    %v1521 = vpop.f32.mrf.mxu0
    %1522 = vmatprep.mubr.f32.mxu0 0.0
    %1523 = vmatmul.mubr.f32.gmra.mxu0 %v1227
    %v1524 = vpop.f32.mrf.mxu0
    %v1525 = vadd.f32 %v1276, %v1524
    %v1526 = vpop.f32.mrf.mxu0
    %1527 = vmatprep.mubr.f32.mxu0 0.0
    %1528 = vmatmul.mubr.f32.gmra.mxu0 %v1228
    %v1529 = vpop.f32.mrf.mxu0
    %v1530 = vadd.f32 %v1276, %v1529
    %v1531 = vpop.f32.mrf.mxu0
    %1532 = vmatprep.mubr.f32.mxu0 0.0
    %1533 = vmatmul.mubr.f32.gmra.mxu0 %v1229
    %v1534 = vpop.f32.mrf.mxu0
    %v1535 = vadd.f32 %v1276, %v1534
    %v1536 = vpop.f32.mrf.mxu0
    %1537 = vmatprep.mubr.f32.mxu0 0.0
    %1538 = vmatmul.mubr.f32.gmra.mxu0 %v1230
    %v1539 = vpop.f32.mrf.mxu0
    %v1540 = vadd.f32 %v1276, %v1539
    %v1541 = vpop.f32.mrf.mxu0
    %1542 = vmatprep.mubr.f32.mxu0 0.0
    %1543 = vmatmul.mubr.f32.gmra.mxu0 %v1231
    %v1544 = vpop.f32.mrf.mxu0
    %v1545 = vadd.f32 %v1276, %v1544
    %v1546 = vpop.f32.mrf.mxu0
    %1547 = vmatprep.mubr.f32.mxu0 0.0
    %1548 = vmatmul.mubr.f32.gmra.mxu0 %v1232
    %v1549 = vpop.f32.mrf.mxu0
    %v1550 = vadd.f32 %v1276, %v1549
    %v1551 = vpop.f32.mrf.mxu0
    %1552 = vmatprep.mubr.f32.mxu0 0.0
    %1553 = vmatmul.mubr.f32.gmra.mxu0 %v1233
    %v1554 = vpop.f32.mrf.mxu0
    %v1555 = vadd.f32 %v1276, %v1554
    %v1556 = vpop.f32.mrf.mxu0
    %1557 = vmatprep.mubr.f32.mxu0 0.0
    %1558 = vmatmul.mubr.f32.gmra.mxu0 %v1234
    %v1559 = vpop.f32.mrf.mxu0
    %v1560 = vadd.f32 %v1276, %v1559
    %v1561 = vpop.f32.mrf.mxu0
    %1562 = vmatprep.mubr.f32.mxu0 0.0
    %1563 = vmatmul.mubr.f32.gmra.mxu0 %v1235
    %v1564 = vpop.f32.mrf.mxu0
    %v1565 = vadd.f32 %v1276, %v1564
    %v1566 = vpop.f32.mrf.mxu0
    %1567 = vmatprep.mubr.f32.mxu0 0.0
    %1568 = vmatmul.mubr.f32.gmra.mxu0 %v1236
    %v1569 = vpop.f32.mrf.mxu0
    %v1570 = vadd.f32 %v1276, %v1569
    %v1571 = vpop.f32.mrf.mxu0
    %1572 = vmatprep.mubr.f32.mxu0 0.0
    %1573 = vmatmul.mubr.f32.gmra.mxu0 %v1237
    %v1574 = vpop.f32.mrf.mxu0
    %v1575 = vadd.f32 %v1276, %v1574
    %v1576 = vpop.f32.mrf.mxu0
    %1577 = vmatprep.mubr.f32.mxu0 0.0
    %1578 = vmatmul.mubr.f32.gmra.mxu0 %v1238
    %v1579 = vpop.f32.mrf.mxu0
    %v1580 = vadd.f32 %v1276, %v1579
    %v1581 = vpop.f32.mrf.mxu0
    %1582 = vmatprep.mubr.f32.mxu0 0.0
    %1583 = vmatmul.mubr.f32.gmra.mxu0 %v1239
    %v1584 = vpop.f32.mrf.mxu0
    %v1585 = vadd.f32 %v1276, %v1584
    %v1586 = vpop.f32.mrf.mxu0
    %1587 = vmatprep.mubr.f32.mxu0 0.0
    %1588 = vmatmul.mubr.f32.gmra.mxu0 %v1240
    %v1589 = vpop.f32.mrf.mxu0
    %v1590 = vadd.f32 %v1276, %v1589
    %v1591 = vpop.f32.mrf.mxu0
    %1592 = vmatprep.mubr.f32.mxu0 0.0
    %1593 = vmatmul.mubr.f32.gmra.mxu0 %v1241
    %v1594 = vpop.f32.mrf.mxu0
    %v1595 = vadd.f32 %v1276, %v1594
    %v1596 = vpop.f32.mrf.mxu0
    %1597 = vmatprep.mubr.f32.mxu0 0.0
    %1598 = vmatmul.mubr.f32.gmra.mxu0 %v1242
    %v1599 = vpop.f32.mrf.mxu0
    %v1600 = vadd.f32 %v1276, %v1599
    %v1601 = vpop.f32.mrf.mxu0
    %1602 = vmatprep.mubr.f32.mxu0 0.0
    %1603 = vmatmul.mubr.f32.gmra.mxu0 %v1243
    %v1604 = vpop.f32.mrf.mxu0
    %v1605 = vadd.f32 %v1276, %v1604
    %v1606 = vpop.f32.mrf.mxu0
    %1607 = vmatprep.mubr.f32.mxu0 0.0
    %1608 = vmatmul.mubr.f32.gmra.mxu0 %v1244
    %v1609 = vpop.f32.mrf.mxu0
    %v1610 = vadd.f32 %v1276, %v1609
    %v1611 = vpop.f32.mrf.mxu0
    %1612 = vmatprep.mubr.f32.mxu0 0.0
    %1613 = vmatmul.mubr.f32.gmra.mxu0 %v1245
    %v1614 = vpop.f32.mrf.mxu0
    %v1615 = vadd.f32 %v1276, %v1614
    %v1616 = vpop.f32.mrf.mxu0
    %1617 = vmatprep.mubr.f32.mxu0 0.0
    %1618 = vmatmul.mubr.f32.gmra.mxu0 %v1246
    %v1619 = vpop.f32.mrf.mxu0
    %v1620 = vadd.f32 %v1276, %v1619
    %v1621 = vpop.f32.mrf.mxu0
    %1622 = vmatprep.mubr.f32.mxu0 0.0
    %1623 = vmatmul.mubr.f32.gmra.mxu0 %v1247
    %v1624 = vpop.f32.mrf.mxu0
    %v1625 = vadd.f32 %v1276, %v1624
    %v1626 = vpop.f32.mrf.mxu0
    %1627 = vmatprep.mubr.f32.mxu0 0.0
    %1628 = vmatmul.mubr.f32.gmra.mxu0 %v1248
    %v1629 = vpop.f32.mrf.mxu0
    %v1630 = vadd.f32 %v1276, %v1629
    %v1631 = vpop.f32.mrf.mxu0
    %1632 = vmatprep.mubr.f32.mxu0 0.0
    %1633 = vmatmul.mubr.f32.gmra.mxu0 %v1249
    %v1634 = vpop.f32.mrf.mxu0
    %v1635 = vadd.f32 %v1276, %v1634
    %v1636 = vpop.f32.mrf.mxu0
    %1637 = vmatprep.mubr.f32.mxu0 0.0
    %1638 = vmatmul.mubr.f32.gmra.mxu0 %v1250
    %v1639 = vpop.f32.mrf.mxu0
    %v1640 = vadd.f32 %v1276, %v1639
    %v1641 = vpop.f32.mrf.mxu0
    %1642 = vmatprep.mubr.f32.mxu0 0.0
    %1643 = vmatmul.mubr.f32.gmra.mxu0 %v1251
    %v1644 = vpop.f32.mrf.mxu0
    %v1645 = vadd.f32 %v1276, %v1644
    %v1646 = vpop.f32.mrf.mxu0
    %1647 = vmatprep.mubr.f32.mxu0 0.0
    %1648 = vmatmul.mubr.f32.gmra.mxu0 %v1252
    %v1649 = vpop.f32.mrf.mxu0
    %v1650 = vadd.f32 %v1276, %v1649
    %v1651 = vpop.f32.mrf.mxu0
    %1652 = vmatprep.mubr.f32.mxu0 0.0
    %1653 = vmatmul.mubr.f32.gmra.mxu0 %v1253
    %v1654 = vpop.f32.mrf.mxu0
    %v1655 = vadd.f32 %v1276, %v1654
    %v1656 = vpop.f32.mrf.mxu0
    %1657 = vmatprep.mubr.f32.mxu0 0.0
    %1658 = vmatmul.mubr.f32.gmra.mxu0 %v1254
    %v1659 = vpop.f32.mrf.mxu0
    %v1660 = vadd.f32 %v1276, %v1659
    %v1661 = vpop.f32.mrf.mxu0
    %1662 = vdwg.mxu0
    %1663 = vst [vmem:[#allocation16] sm:$0xff] %v1345
    %1664 = vst [vmem:[#allocation16 + $0x8] sm:$0xff] %v1350
    %1665 = vst [vmem:[#allocation16 + $0x10] sm:$0xff] %v1355
    %1666 = vst [vmem:[#allocation16 + $0x18] sm:$0xff] %v1360
    %1667 = vst [vmem:[#allocation16 + $0x20] sm:$0xff] %v1365
    %1668 = vst [vmem:[#allocation16 + $0x28] sm:$0xff] %v1370
    %1669 = vst [vmem:[#allocation16 + $0x30] sm:$0xff] %v1375
    %1670 = vst [vmem:[#allocation16 + $0x38] sm:$0xff] %v1380
    %1671 = vst [vmem:[#allocation16 + $0x40] sm:$0xff] %v1385
    %1672 = vst [vmem:[#allocation16 + $0x48] sm:$0xff] %v1390
    %1673 = vst [vmem:[#allocation16 + $0x50] sm:$0xff] %v1395
    %1674 = vst [vmem:[#allocation16 + $0x58] sm:$0xff] %v1400
    %1675 = vst [vmem:[#allocation16 + $0x60] sm:$0xff] %v1405
    %1676 = vst [vmem:[#allocation16 + $0x68] sm:$0xff] %v1410
    %1677 = vst [vmem:[#allocation16 + $0x70] sm:$0xff] %v1415
    %1678 = vst [vmem:[#allocation16 + $0x78] sm:$0xff] %v1420
    %1679 = vst [vmem:[#allocation16 + $0x80] sm:$0xff] %v1425
    %1680 = vst [vmem:[#allocation16 + $0x88] sm:$0xff] %v1430
    %1681 = vst [vmem:[#allocation16 + $0x90] sm:$0xff] %v1435
    %1682 = vst [vmem:[#allocation16 + $0x98] sm:$0xff] %v1440
    %1683 = vst [vmem:[#allocation16 + $0xa0] sm:$0xff] %v1445
    %1684 = vst [vmem:[#allocation16 + $0xa8] sm:$0xff] %v1450
    %1685 = vst [vmem:[#allocation16 + $0xb0] sm:$0xff] %v1455
    %1686 = vst [vmem:[#allocation16 + $0xb8] sm:$0xff] %v1460
    %1687 = vst [vmem:[#allocation16 + $0xc0] sm:$0xff] %v1465
    %1688 = vst [vmem:[#allocation16 + $0xc8] sm:$0xff] %v1470
    %1689 = vst [vmem:[#allocation16 + $0xd0] sm:$0xff] %v1475
    %1690 = vst [vmem:[#allocation16 + $0xd8] sm:$0xff] %v1480
    %1691 = vst [vmem:[#allocation16 + $0xe0] sm:$0xff] %v1485
    %1692 = vst [vmem:[#allocation16 + $0xe8] sm:$0xff] %v1490
    %1693 = vst [vmem:[#allocation16 + $0xf0] sm:$0xff] %v1495
    %1694 = vst [vmem:[#allocation16 + $0xf8] sm:$0xff] %v1500
    %1695 = vst [vmem:[#allocation16 + $0x100] sm:$0xff] %v1505
    %1696 = vst [vmem:[#allocation16 + $0x108] sm:$0xff] %v1510
    %1697 = vst [vmem:[#allocation16 + $0x110] sm:$0xff] %v1515
    %1698 = vst [vmem:[#allocation16 + $0x118] sm:$0xff] %v1520
    %1699 = vst [vmem:[#allocation16 + $0x120] sm:$0xff] %v1525
    %1700 = vst [vmem:[#allocation16 + $0x128] sm:$0xff] %v1530
    %1701 = vst [vmem:[#allocation16 + $0x130] sm:$0xff] %v1535
    %1702 = vst [vmem:[#allocation16 + $0x138] sm:$0xff] %v1540
    %1703 = vst [vmem:[#allocation16 + $0x140] sm:$0xff] %v1545
    %1704 = vst [vmem:[#allocation16 + $0x148] sm:$0xff] %v1550
    %1705 = vst [vmem:[#allocation16 + $0x150] sm:$0xff] %v1555
    %1706 = vst [vmem:[#allocation16 + $0x158] sm:$0xff] %v1560
    %1707 = vst [vmem:[#allocation16 + $0x160] sm:$0xff] %v1565
    %1708 = vst [vmem:[#allocation16 + $0x168] sm:$0xff] %v1570
    %1709 = vst [vmem:[#allocation16 + $0x170] sm:$0xff] %v1575
    %1710 = vst [vmem:[#allocation16 + $0x178] sm:$0xff] %v1580
    %1711 = vst [vmem:[#allocation16 + $0x180] sm:$0xff] %v1585
    %1712 = vst [vmem:[#allocation16 + $0x188] sm:$0xff] %v1590
    %1713 = vst [vmem:[#allocation16 + $0x190] sm:$0xff] %v1595
    %1714 = vst [vmem:[#allocation16 + $0x198] sm:$0xff] %v1600
    %1715 = vst [vmem:[#allocation16 + $0x1a0] sm:$0xff] %v1605
    %1716 = vst [vmem:[#allocation16 + $0x1a8] sm:$0xff] %v1610
    %1717 = vst [vmem:[#allocation16 + $0x1b0] sm:$0xff] %v1615
    %1718 = vst [vmem:[#allocation16 + $0x1b8] sm:$0xff] %v1620
    %1719 = vst [vmem:[#allocation16 + $0x1c0] sm:$0xff] %v1625
    %1720 = vst [vmem:[#allocation16 + $0x1c8] sm:$0xff] %v1630
    %1721 = vst [vmem:[#allocation16 + $0x1d0] sm:$0xff] %v1635
    %1722 = vst [vmem:[#allocation16 + $0x1d8] sm:$0xff] %v1640
    %1723 = vst [vmem:[#allocation16 + $0x1e0] sm:$0xff] %v1645
    %1724 = vst [vmem:[#allocation16 + $0x1e8] sm:$0xff] %v1650
    %1725 = vst [vmem:[#allocation16 + $0x1f0] sm:$0xff] %v1655
    %1726 = vst [vmem:[#allocation16 + $0x1f8] sm:$0xff] %v1660
    // Predicated region
    $region62: #{tpu_custom_call.1} parent=1 // pred_check
      _
    $region63: #{tpu_custom_call.1} parent=1 // pred_check_branch
      %1728 = sbr.rel (0) target = $region65
    $region64: #{tpu_custom_call.1} parent=1 // pred_region
      %s1730 = ssub.s32 8192, 8192
      %1731 = vsyncadd [#allocation4], %s1730
      %s1732 = sshll.u32 [#allocation13], 4
      %s1733 = int_to_ptr.vmem [resolvable:$true] %s1732
      %1738 = dma.vmem_to_hbm [thread:$0]  %s1733, 8192, %s9, [#allocation4], 128, 128, 8
    $region65: #{tpu_custom_call.1} parent=1 // pred_fallthru
      _
    // Predicated region
    $region66: #{tpu_custom_call.1} parent=1 // pred_check
      _
    $region67: #{tpu_custom_call.1} parent=1 // pred_check_branch
      %1740 = sbr.rel (0) target = $region69
    $region68: #{tpu_custom_call.1} parent=1 // pred_region
      %s1742 = ssub.s32 8192, 8192
      %1743 = vsyncadd [#allocation15], %s1742
      %s1744 = sshll.u32 [#allocation14], 4
      %s1745 = int_to_ptr.vmem [resolvable:$true] %s1744
      %1750 = dma.vmem_to_hbm [thread:$0]  %s1745, 8192, %s10, [#allocation15], 128, 128, 8
    $region69: #{tpu_custom_call.1} parent=1 // pred_fallthru
      _
    // Predicated region
    $region70: #{tpu_custom_call.1} parent=1 // pred_check
      _
    $region71: #{tpu_custom_call.1} parent=1 // pred_check_branch
      %1752 = sbr.rel (0) target = $region73
    $region72: #{tpu_custom_call.1} parent=1 // pred_region
      %s1754 = ssub.s32 8192, 8192
      %1755 = vsyncadd [#allocation15], %s1754
      %s1756 = sshll.u32 [#allocation16], 4
      %s1757 = int_to_ptr.vmem [resolvable:$true] %s1756
      %1762 = dma.vmem_to_hbm [thread:$0]  %s1757, 8192, %s11, [#allocation15], 128, 128, 8
    $region73: #{tpu_custom_call.1} parent=1 // pred_fallthru
      _
    // Predicated region
    $region74: #{tpu_custom_call.1} parent=1 // pred_check
      _
    $region75: #{tpu_custom_call.1} parent=1 // pred_check_branch
      %1764 = sbr.rel (0) target = $region77
    $region76: #{tpu_custom_call.1} parent=1 // pred_region
      %1765 = dma.done [#allocation4], 8192
    $region77: #{tpu_custom_call.1} parent=1 // pred_fallthru
      _
    // Predicated region
    $region78: #{tpu_custom_call.1} parent=1 // pred_check
      _
    $region79: #{tpu_custom_call.1} parent=1 // pred_check_branch
      %1767 = sbr.rel (0) target = $region81
    $region80: #{tpu_custom_call.1} parent=1 // pred_region
      %1768 = dma.done [#allocation15], 8192
    $region81: #{tpu_custom_call.1} parent=1 // pred_fallthru
      _
    // Predicated region
    $region82: #{tpu_custom_call.1} parent=1 // pred_check
      _
    $region83: #{tpu_custom_call.1} parent=1 // pred_check_branch
      %1770 = sbr.rel (0) target = $region85
    $region84: #{tpu_custom_call.1} parent=1 // pred_region
      %1771 = dma.done [#allocation15], 8192
    $region85: #{tpu_custom_call.1} parent=1 // pred_fallthru
      _
    %1772 = vsyncpa [#allocation3], 1
    %1773 = vsyncpa [#allocation6], 1
    %1774 = vsyncpa [#allocation9], 1
    %1775 = vsyncpa [#allocation12], 1
    %1776 = vsyncpa [#allocation4], 1
    %1777 = vsyncpa [#allocation15], 1

</llo_original>
